<compile_context>
chip_gen: v7x
topology: tpu7x:2x2x1
jax: 0.10.0
libtpu: 0.0.40
codegen_flags: <defaults>
</compile_context>

<pallas_src>
import numpy as np
import jax
import jax.numpy as jnp
from jax.experimental import pallas as pl
from jax.experimental.pallas import tpu as pltpu

MEAN = np.array([0.485, 0.456, 0.406], dtype=np.float32)
STD = np.array([0.229, 0.224, 0.225], dtype=np.float32)
OUT_HW = 224          # final spatial size fed to the inner model
IMAGE_WIDTH = 299     # fixed in InpModel.forward: input_diversity(x, 299, ...)


def bilinear_matrix(out_size, in_size):
    """Interpolation matrix matching F.interpolate(mode='bilinear', align_corners=True)."""
    m = np.zeros((out_size, in_size), dtype=np.float64)
    if out_size == 1:
        m[0, 0] = 1.0
        return m
    scale = (in_size - 1) / (out_size - 1)
    for i in range(out_size):
        s = i * scale
        i0 = min(int(np.floor(s)), in_size - 1)
        i1 = min(i0 + 1, in_size - 1)
        w1 = s - i0
        m[i, i0] += 1.0 - w1
        m[i, i1] += w1
    return m


def sample_diversity_matrices(h_in, w_in, image_resize, prob, rng):
    """Host-side random draws of input_diversity (redrawn per forward call, like the
    PyTorch module's np.random.* calls), composed in float64 into single (224, H_in) /
    (224, W_in) matrices and returned in f32 (Mw is returned transposed)."""
    rnd = int(rng.randint(IMAGE_WIDTH, image_resize))
    h_rem = image_resize - rnd
    w_rem = image_resize - rnd
    pad_top = int(rng.randint(0, h_rem))
    pad_left = int(rng.randint(0, w_rem))
    # Matches the reference exactly: `if np.random.random() > prob: ret = padded`.
    use_padded = rng.rand() > prob

    m_224_299 = bilinear_matrix(OUT_HW, IMAGE_WIDTH)        # final 299 -> 224 resize
    if use_padded:
        # resize(H_in -> rnd), zero-pad (rnd -> image_resize), resize(-> 299), resize(-> 224)
        m_299_330 = bilinear_matrix(IMAGE_WIDTH, image_resize)
        mh = m_224_299 @ m_299_330[:, pad_top:pad_top + rnd] @ bilinear_matrix(rnd, h_in)
        mw = m_224_299 @ m_299_330[:, pad_left:pad_left + rnd] @ bilinear_matrix(rnd, w_in)
    else:
        # branch where ret = x: resize(H_in -> 299), resize(299 -> 224)
        mh = m_224_299 @ bilinear_matrix(IMAGE_WIDTH, h_in)
        mw = m_224_299 @ bilinear_matrix(IMAGE_WIDTH, w_in)
    return (jnp.asarray(mh, dtype=jnp.float32),       # (224, H_in)
            jnp.asarray(mw.T, dtype=jnp.float32))     # (W_in, 224)


def preprocess_kernel(x_ref, mhb_ref, mwt_ref, bias_ref, o_ref, s_ref):
    # One block of B images (all channels fused) per grid step.
    #   x_ref:    (B, C, H, W)          source dtype (clamp + cast happen in-kernel)
    #   mhb_ref:  (B*C, 224, H) f32     row matrix with 1/std_c pre-folded (resident)
    #   mwt_ref:  (W, 224)      f32     column matrix, transposed (resident)
    #   bias_ref: (1, C, 1, 1)  f32     -mean/std
    #   o_ref:    (B, C, 224, 224) bf16 normalized activation (what the inner model reads)
    #   s_ref:    (B, C, 1)     f32     fused GAP partials (full spatial sum per n, c)
    b, c, h, w = x_ref.shape
    q = mwt_ref.shape[1]

    # Clamp + cast once on the whole (B, C, H, W) block.
    xs = jnp.clip(x_ref[...].astype(jnp.float32), 0.0, 1.0)

    # One fused MXU dot over all images & channels (lane-dense: 224 on the lane axis).
    t = jnp.dot(xs.reshape(b * c * h, w), mwt_ref[...],
                preferred_element_type=jnp.float32)                     # (B*C*H, 224)

    # Single batched second dot over the (image, channel) batch; f32 operands keep the
    # intermediate at full precision (K = H is small, so MXU cost is negligible).
    y = jnp.einsum("nqh,nhk->nqk", mhb_ref[...], t.reshape(b * c, h, q),
                   preferred_element_type=jnp.float32)                  # (B*C, 224, 224)

    yn = y.reshape(b, c, q, q) + bias_ref[...]                          # + (-mean/std)
    o_ref[...] = yn.astype(o_ref.dtype)                                 # bf16 writeback
    # Fused partial GAP: full scalar sum per (image, channel).
    s_ref[...] = jnp.sum(jnp.sum(yn, axis=-1), axis=-1, keepdims=True)  # (B, C, 1)


def _pick_batch_block(n, c, h, w, x_itemsize):
    # Rough per-image VMEM bytes per pipeline step: input block + bf16 output block +
    # f32 in-kernel intermediates.  Kept small enough that double-buffered BlockSpec
    # traffic fits every generation's default scoped VMEM (16 MiB v5e, 32 MiB v6e/v7x;
    # v7x only has 64 MiB physical, so tiles are sized conservatively).
    per_img = c * (h * w * max(x_itemsize, 4) + OUT_HW * OUT_HW * (2 + 4))
    budget = 6 * 1024 * 1024
    b = int(max(1, min(8, budget // per_img, n)))
    while b > 1 and (n + b - 1) // b < 2:   # >= 2 parallel grid steps keeps both v7x TCs busy
        b -= 1
    while n % b != 0:                        # exact divisor: no padding / masking needed
        b -= 1
    return b


def inp_model_forward(x, w_head, b_head, mh, mwt):
    n, c, h, w = x.shape
    bsz = _pick_batch_block(n, c, h, w, x.dtype.itemsize)

    inv_std = (1.0 / STD).astype(np.float32)                 # (C,)
    bias = jnp.asarray(-MEAN / STD, jnp.float32).reshape(1, c, 1, 1)
    # Fold the per-channel 1/std into the tiny resident row matrix (exact, by linearity)
    # and pre-broadcast it over the fused (image, channel) batch of one grid step so the
    # in-kernel second matmul is a single batched MXU call (no per-channel unrolling).
    mh_scaled = mh[None] * jnp.asarray(np.tile(inv_std, bsz))[:, None, None]  # (bsz*C,224,H)

    x_norm, sums = pl.pallas_call(
        preprocess_kernel,
        out_shape=(jax.ShapeDtypeStruct((n, c, OUT_HW, OUT_HW), jnp.bfloat16),
                   jax.ShapeDtypeStruct((n, c, 1), jnp.float32)),
        grid=(n // bsz,),
        in_specs=[
            pl.BlockSpec((bsz, c, h, w), lambda i: (i, 0, 0, 0)),        # x, source dtype
            pl.BlockSpec((bsz * c, OUT_HW, h), lambda i: (0, 0, 0)),     # Mh*1/std (resident)
            pl.BlockSpec((w, OUT_HW), lambda i: (0, 0)),                 # Mw^T     (resident)
            pl.BlockSpec((1, c, 1, 1), lambda i: (0, 0, 0, 0)),          # -mean/std
        ],
        out_specs=[
            pl.BlockSpec((bsz, c, OUT_HW, OUT_HW), lambda i: (i, 0, 0, 0)),
            pl.BlockSpec((bsz, c, 1), lambda i: (i, 0, 0)),
        ],
        compiler_params=pltpu.CompilerParams(
            dimension_semantics=("parallel",)),   # megacore: batch blocks split across TCs
    )(x, mh_scaled, mwt, bias)

    # TODO(synk): InpModel wraps an arbitrary user-provided `model`; x_norm (bf16) is the
    # (N, C, 224, 224) tensor that model would consume.  The stand-in here is GAP+linear,
    # whose GAP uses the fused per-(n, c) sums, so the degenerate (N, C) x (C, classes)
    # head is computed in plain XLA instead of a second pallas_call.
    feats = sums[..., 0] * (1.0 / float(OUT_HW * OUT_HW))     # (N, C)
    logits = feats @ w_head + b_head                          # (N, num_classes)
    return logits, x_norm


if __name__ == "__main__":
    key = jax.random.PRNGKey(0)
    kx, kw, kb = jax.random.split(key, 3)
    N, C, H, W = 2, 3, 16, 16          # 3 channels fixed by the ImageNet mean/std buffers
    NUM_CLASSES = 10
    x = jax.random.uniform(kx, (N, C, H, W), jnp.float32, minval=-0.2, maxval=1.2)
    w_head = 0.1 * jax.random.normal(kw, (C, NUM_CLASSES), jnp.float32)
    b_head = 0.01 * jax.random.normal(kb, (1, NUM_CLASSES), jnp.float32)

    # Host-side random draws of input_diversity, redrawn per forward call and passed as
    # runtime arrays (so per-call stochastic diversity survives even if the forward is jitted).
    rng = np.random.RandomState(0)
    mh, mwt = sample_diversity_matrices(H, W, 330, 0.5, rng)

    logits, x_norm = inp_model_forward(x, w_head, b_head, mh, mwt)
    jax.block_until_ready((logits, x_norm))
    print("KERNEL_OK")
</pallas_src>

<mosaic_0001>
module attributes {stable_mosaic.version = 11 : i64} {
  func.func @preprocess_kernel(%arg0: i32, %arg1: memref<1x3x16x16xf32, #tpu.memory_space<vmem>>, %arg2: memref<3x224x16xf32, #tpu.memory_space<vmem>>, %arg3: memref<16x224xf32, #tpu.memory_space<vmem>>, %arg4: memref<1x3x1x1xf32, #tpu.memory_space<vmem>>, %arg5: memref<1x3x224x224xbf16, #tpu.memory_space<vmem>>, %arg6: memref<1x3x1xf32, #tpu.memory_space<vmem>>) attributes {dimension_semantics = [#tpu.dimension_semantics<parallel>], iteration_bounds = array<i64: 2>, scalar_prefetch = 0 : i64, scratch_operands = 0 : i64, tpu.core_type = #tpu.core_type<tc>, window_params = [{transform_indices = @transform_0, window_bounds = array<i64: 1, 3, 16, 16>}, {pipeline_mode = #tpu.pipeline_mode<synchronous>, transform_indices = @transform_1, window_bounds = array<i64: 3, 224, 16>}, {pipeline_mode = #tpu.pipeline_mode<synchronous>, transform_indices = @transform_2, window_bounds = array<i64: 16, 224>}, {pipeline_mode = #tpu.pipeline_mode<synchronous>, transform_indices = @transform_3, window_bounds = array<i64: 1, 3, 1, 1>}, {transform_indices = @transform_4, window_bounds = array<i64: 1, 3, 224, 224>}, {transform_indices = @transform_5, window_bounds = array<i64: 1, 3, 1>}]} {
    %c0 = arith.constant 0 : index
    %c0_0 = arith.constant 0 : index
    %c0_1 = arith.constant 0 : index
    %c0_2 = arith.constant 0 : index
    %0 = vector.load %arg1[%c0, %c0_0, %c0_1, %c0_2] : memref<1x3x16x16xf32, #tpu.memory_space<vmem>>, vector<1x3x16x16xf32>
    %cst = arith.constant 0.000000e+00 : f32
    %cst_3 = arith.constant 1.000000e+00 : f32
    %1 = vector.broadcast %cst : f32 to vector<1x3x16x16xf32>
    %2 = arith.maximumf %1, %0 : vector<1x3x16x16xf32>
    %3 = vector.broadcast %cst_3 : f32 to vector<1x3x16x16xf32>
    %4 = arith.minimumf %3, %2 : vector<1x3x16x16xf32>
    %5 = vector.shape_cast %4 : vector<1x3x16x16xf32> to vector<48x16xf32>
    %c0_4 = arith.constant 0 : index
    %c0_5 = arith.constant 0 : index
    %6 = vector.load %arg3[%c0_4, %c0_5] : memref<16x224xf32, #tpu.memory_space<vmem>>, vector<16x224xf32>
    %cst_6 = arith.constant dense<0.000000e+00> : vector<48x224xf32>
    %7 = tpu.matmul %5, %6, %cst_6 {dimension_numbers = #tpu.dot_dimension_numbers<[1], [0], [0], [1], [0, 0, 1, 1], [], []>} : vector<48x16xf32>, vector<16x224xf32>, vector<48x224xf32> -> vector<48x224xf32>
    %c0_7 = arith.constant 0 : index
    %c0_8 = arith.constant 0 : index
    %c0_9 = arith.constant 0 : index
    %8 = vector.load %arg2[%c0_7, %c0_8, %c0_9] : memref<3x224x16xf32, #tpu.memory_space<vmem>>, vector<3x224x16xf32>
    %9 = vector.shape_cast %7 : vector<48x224xf32> to vector<3x16x224xf32>
    "tpu.trace_start"() <{level = 10 : i32, message = "nqh,nhk->nqk"}> : () -> ()
    %cst_10 = arith.constant dense<0.000000e+00> : vector<3x224x224xf32>
    %10 = tpu.matmul %8, %9, %cst_10 {dimension_numbers = #tpu.dot_dimension_numbers<[2], [1], [1], [2], [0, 0, 0, 1, 1, 2], [0], [0]>} : vector<3x224x16xf32>, vector<3x16x224xf32>, vector<3x224x224xf32> -> vector<3x224x224xf32>
    "tpu.trace_stop"() : () -> ()
    %11 = vector.shape_cast %10 : vector<3x224x224xf32> to vector<1x3x224x224xf32>
    %c0_11 = arith.constant 0 : index
    %c0_12 = arith.constant 0 : index
    %c0_13 = arith.constant 0 : index
    %c0_14 = arith.constant 0 : index
    %12 = vector.load %arg4[%c0_11, %c0_12, %c0_13, %c0_14] : memref<1x3x1x1xf32, #tpu.memory_space<vmem>>, vector<1x3x1x1xf32>
    %13 = vector.broadcast %12 : vector<1x3x1x1xf32> to vector<1x3x224x224xf32>
    %14 = arith.addf %11, %13 : vector<1x3x224x224xf32>
    %15 = arith.truncf %14 : vector<1x3x224x224xf32> to vector<1x3x224x224xbf16>
    %c0_15 = arith.constant 0 : index
    %c0_16 = arith.constant 0 : index
    %c0_17 = arith.constant 0 : index
    %c0_18 = arith.constant 0 : index
    %16 = vector.load %arg5[%c0_15, %c0_16, %c0_17, %c0_18] : memref<1x3x224x224xbf16, #tpu.memory_space<vmem>>, vector<1x3x224x224xbf16>
    tpu.vector_store %arg5[%c0_15, %c0_16, %c0_17, %c0_18], %15 {strides = array<i32>} : memref<1x3x224x224xbf16, #tpu.memory_space<vmem>>, vector<1x3x224x224xbf16>,
    %cst_19 = arith.constant dense<0.000000e+00> : vector<1x3x224xf32>
    %17 = vector.multi_reduction <add>, %14, %cst_19 [3] : vector<1x3x224x224xf32> to vector<1x3x224xf32>
    %cst_20 = arith.constant dense<0.000000e+00> : vector<1x3xf32>
    %18 = vector.multi_reduction <add>, %17, %cst_20 [2] : vector<1x3x224xf32> to vector<1x3xf32>
    %19 = vector.shape_cast %18 : vector<1x3xf32> to vector<1x3x1xf32>
    %c0_21 = arith.constant 0 : index
    %c0_22 = arith.constant 0 : index
    %c0_23 = arith.constant 0 : index
    %20 = vector.load %arg6[%c0_21, %c0_22, %c0_23] : memref<1x3x1xf32, #tpu.memory_space<vmem>>, vector<1x3x1xf32>
    tpu.vector_store %arg6[%c0_21, %c0_22, %c0_23], %19 {strides = array<i32>} : memref<1x3x1xf32, #tpu.memory_space<vmem>>, vector<1x3x1xf32>,
    return
  }
  func.func @transform_0(%arg0: i32) -> (i32, i32, i32, i32) {
    %c0_i32 = arith.constant 0 : i32
    %c0_i32_0 = arith.constant 0 : i32
    %c0_i32_1 = arith.constant 0 : i32
    %c0_i32_2 = arith.constant 0 : i32
    return %arg0, %c0_i32, %c0_i32_0, %c0_i32_1 : i32, i32, i32, i32
  }
  func.func @transform_1(%arg0: i32) -> (i32, i32, i32) {
    %c0_i32 = arith.constant 0 : i32
    %c0_i32_0 = arith.constant 0 : i32
    %c0_i32_1 = arith.constant 0 : i32
    %c0_i32_2 = arith.constant 0 : i32
    return %c0_i32, %c0_i32_0, %c0_i32_1 : i32, i32, i32
  }
  func.func @transform_2(%arg0: i32) -> (i32, i32) {
    %c0_i32 = arith.constant 0 : i32
    %c0_i32_0 = arith.constant 0 : i32
    %c0_i32_1 = arith.constant 0 : i32
    return %c0_i32, %c0_i32_0 : i32, i32
  }
  func.func @transform_3(%arg0: i32) -> (i32, i32, i32, i32) {
    %c0_i32 = arith.constant 0 : i32
    %c0_i32_0 = arith.constant 0 : i32
    %c0_i32_1 = arith.constant 0 : i32
    %c0_i32_2 = arith.constant 0 : i32
    %c0_i32_3 = arith.constant 0 : i32
    return %c0_i32, %c0_i32_0, %c0_i32_1, %c0_i32_2 : i32, i32, i32, i32
  }
  func.func @transform_4(%arg0: i32) -> (i32, i32, i32, i32) {
    %c0_i32 = arith.constant 0 : i32
    %c0_i32_0 = arith.constant 0 : i32
    %c0_i32_1 = arith.constant 0 : i32
    %c0_i32_2 = arith.constant 0 : i32
    return %arg0, %c0_i32, %c0_i32_0, %c0_i32_1 : i32, i32, i32, i32
  }
  func.func @transform_5(%arg0: i32) -> (i32, i32, i32) {
    %c0_i32 = arith.constant 0 : i32
    %c0_i32_0 = arith.constant 0 : i32
    %c0_i32_1 = arith.constant 0 : i32
    return %arg0, %c0_i32, %c0_i32_0 : i32, i32, i32
  }
}

</mosaic_0001>

<llo_original>
// kernel: tpu_custom_call.1
$region0: #{tpu_custom_call.1}
  #allocation0 [shape = 'u32[]', space=smem, size = 0x4, offset = 0x4, fixed_abs, tag = 'smem constant byte address 0x4 - core index']
  #allocation1 [shape = 'u32[144,128]{1,0:T(1,128)}', space=vmem, size = 0x12000, scoped, tag = 'internal scratch']
  %s0 = inlined_call_operand.vmem [shape: f32[2,3,16,16], index: 0, kind: input, shape index: {}]
  %s1 = inlined_call_operand.vmem [shape: f32[3,224,16], index: 1, kind: input, shape index: {}]
  %s2 = inlined_call_operand.vmem [shape: f32[16,224], index: 2, kind: input, shape index: {}]
  %s3 = inlined_call_operand.vmem [shape: f32[1,3,1,1], index: 3, kind: input, shape index: {}]
  %s4 = inlined_call_operand.hbm [shape: bf16[2,3,224,224], index: 4, kind: output, shape index: {0}]
  %s5 = inlined_call_operand.vmem [shape: f32[2,3,1], index: 5, kind: output, shape index: {1}]
  %6 = xla_tuple %s4, %s5
  %s7 = sld [smem:[#allocation0]]
  $region57: #{tpu_custom_call.1} parent=0
    _
  %s9 = ssub.s32 1, %s7
  %s10 = scalar_select 0, %s9, %s7
  $region1: #{tpu_custom_call.1} parent=0
    #allocation2 [shape = 'u8[688128]{0}', space=vmem, size = 0xa8000, scoped, tag = 'output window, operand 0']
    #allocation3 [shape = 's32[2]{0}', space=sflag, size = 0x8, scoped, tag = 'scoped memory for tpu_custom_call.1']
    %11 = vsyncpa [#allocation3], 0
    %s12 = scalar_lea.sflag [#allocation3], 1
    %13 = vsyncpa %s12, 0
    loop: start=0, step=1, limit=4
    $region2: #{tpu_custom_call.1} parent=1 // loop_pre_header
      _
    $region3: #{tpu_custom_call.1} parent=1 // loop_header
      %s15 = sphi 0, %s19
      %p16 = scmp.ge.s32.totalorder %s15, 4
      %s25 = sphi 0, %s27
      %s28 = sphi 0, %s25
      %s29 = sphi 0, %s28
      %s45 = sphi 0, %s29
      %s49 = sphi 0, %s49
      %s51 = sphi 0, %s49
      %s52 = sphi 0, %s51
      %s66 = sphi 0, %s52
      %s70 = sphi 0, %s70
      %s72 = sphi 0, %s70
      %s73 = sphi 0, %s72
      %s87 = sphi 0, %s73
      %s91 = sphi 0, %s91
      %s93 = sphi 0, %s91
      %s94 = sphi 0, %s93
      %s108 = sphi 0, %s94
      %s114 = sphi 0, %s116
      %s117 = sphi 0, %s114
      %s118 = sphi 0, %s117
      %s134 = sphi 0, %s118
      %s140 = sphi 0, %s142
      %s143 = sphi 0, %s140
      %s144 = sphi 0, %s143
      %s160 = sphi 0, %s144
    $region4: #{tpu_custom_call.1} parent=1 // loop_header_branch
      %18 = sbr.rel (%p16) target = $region8
    $region5: #{tpu_custom_call.1} parent=1 // loop_body
      %s20 = ssub.s32 %s15, 1
      %s21 = ssub.s32 %s15, 2
      %s22 = sadd.s32 %s15, 1
      %s23 = ssub.s32 %s15, %s22
      %p24 = scmp.eq.s32.totalorder %s23, 0
      %s26 = sadd.s32 %s25, 1
      %s27 = scalar_select %p24, %s25, %s26
      %p30 = pneg %p24
      %p31 = scmp.eq.s32.totalorder %s15, 1
      %p32 = por %p30, %p31
      %p33 = scmp.ne.s32.totalorder %s25, %s28
      %p34 = scmp.eq.s32.totalorder %s15, 0
      %p35 = por %p33, %p34
      %p36 = scmp.ne.s32.totalorder %s25, %s28
      %p37 = scmp.eq.s32.totalorder %s20, 1
      %p38 = por %p36, %p37
      %p39 = scmp.ne.s32.totalorder %s28, %s29
      %p40 = scmp.eq.s32.totalorder %s20, 0
      %p41 = por %p39, %p40
      %p42 = scmp.ne.s32.totalorder %s28, %s29
      %p43 = scmp.eq.s32.totalorder %s21, 1
      %p44 = por %p42, %p43
      %p46 = scmp.ne.s32.totalorder %s29, %s45
      %p47 = scmp.eq.s32.totalorder %s21, 0
      %p48 = por %p46, %p47
      %s50 = sadd.s32 %s49, 1
      %p53 = scmp.eq.s32.totalorder %s15, 1
      %p54 = scmp.ne.s32.totalorder %s49, %s51
      %p55 = scmp.eq.s32.totalorder %s15, 0
      %p56 = por %p54, %p55
      %p57 = scmp.ne.s32.totalorder %s49, %s51
      %p58 = scmp.eq.s32.totalorder %s20, 1
      %p59 = por %p57, %p58
      %p60 = scmp.ne.s32.totalorder %s51, %s52
      %p61 = scmp.eq.s32.totalorder %s20, 0
      %p62 = por %p60, %p61
      %p63 = scmp.ne.s32.totalorder %s51, %s52
      %p64 = scmp.eq.s32.totalorder %s21, 1
      %p65 = por %p63, %p64
      %p67 = scmp.ne.s32.totalorder %s52, %s66
      %p68 = scmp.eq.s32.totalorder %s21, 0
      %p69 = por %p67, %p68
      %s71 = sadd.s32 %s70, 1
      %p74 = scmp.eq.s32.totalorder %s15, 1
      %p75 = scmp.ne.s32.totalorder %s70, %s72
      %p76 = scmp.eq.s32.totalorder %s15, 0
      %p77 = por %p75, %p76
      %p78 = scmp.ne.s32.totalorder %s70, %s72
      %p79 = scmp.eq.s32.totalorder %s20, 1
      %p80 = por %p78, %p79
      %p81 = scmp.ne.s32.totalorder %s72, %s73
      %p82 = scmp.eq.s32.totalorder %s20, 0
      %p83 = por %p81, %p82
      %p84 = scmp.ne.s32.totalorder %s72, %s73
      %p85 = scmp.eq.s32.totalorder %s21, 1
      %p86 = por %p84, %p85
      %p88 = scmp.ne.s32.totalorder %s73, %s87
      %p89 = scmp.eq.s32.totalorder %s21, 0
      %p90 = por %p88, %p89
      %s92 = sadd.s32 %s91, 1
      %p95 = scmp.eq.s32.totalorder %s15, 1
      %p96 = scmp.ne.s32.totalorder %s91, %s93
      %p97 = scmp.eq.s32.totalorder %s15, 0
      %p98 = por %p96, %p97
      %p99 = scmp.ne.s32.totalorder %s91, %s93
      %p100 = scmp.eq.s32.totalorder %s20, 1
      %p101 = por %p99, %p100
      %p102 = scmp.ne.s32.totalorder %s93, %s94
      %p103 = scmp.eq.s32.totalorder %s20, 0
      %p104 = por %p102, %p103
      %p105 = scmp.ne.s32.totalorder %s93, %s94
      %p106 = scmp.eq.s32.totalorder %s21, 1
      %p107 = por %p105, %p106
      %p109 = scmp.ne.s32.totalorder %s94, %s108
      %p110 = scmp.eq.s32.totalorder %s21, 0
      %p111 = por %p109, %p110
      %s112 = ssub.s32 %s15, %s22
      %p113 = scmp.eq.s32.totalorder %s112, 0
      %s115 = sadd.s32 %s114, 1
      %s116 = scalar_select %p113, %s114, %s115
      %p119 = pneg %p113
      %p120 = scmp.eq.s32.totalorder %s15, 1
      %p121 = por %p119, %p120
      %p122 = scmp.ne.s32.totalorder %s114, %s117
      %p123 = scmp.eq.s32.totalorder %s15, 0
      %p124 = por %p122, %p123
      %p125 = scmp.ne.s32.totalorder %s114, %s117
      %p126 = scmp.eq.s32.totalorder %s20, 1
      %p127 = por %p125, %p126
      %p128 = scmp.ne.s32.totalorder %s117, %s118
      %p129 = scmp.eq.s32.totalorder %s20, 0
      %p130 = por %p128, %p129
      %p131 = scmp.ne.s32.totalorder %s117, %s118
      %p132 = scmp.eq.s32.totalorder %s21, 1
      %p133 = por %p131, %p132
      %p135 = scmp.ne.s32.totalorder %s118, %s134
      %p136 = scmp.eq.s32.totalorder %s21, 0
      %p137 = por %p135, %p136
      %s138 = ssub.s32 %s15, %s22
      %p139 = scmp.eq.s32.totalorder %s138, 0
      %s141 = sadd.s32 %s140, 1
      %s142 = scalar_select %p139, %s140, %s141
      %p145 = pneg %p139
      %p146 = scmp.eq.s32.totalorder %s15, 1
      %p147 = por %p145, %p146
      %p148 = scmp.ne.s32.totalorder %s140, %s143
      %p149 = scmp.eq.s32.totalorder %s15, 0
      %p150 = por %p148, %p149
      %p151 = scmp.ne.s32.totalorder %s140, %s143
      %p152 = scmp.eq.s32.totalorder %s20, 1
      %p153 = por %p151, %p152
      %p154 = scmp.ne.s32.totalorder %s143, %s144
      %p155 = scmp.eq.s32.totalorder %s20, 0
      %p156 = por %p154, %p155
      %p157 = scmp.ne.s32.totalorder %s143, %s144
      %p158 = scmp.eq.s32.totalorder %s21, 1
      %p159 = por %p157, %p158
      %p161 = scmp.ne.s32.totalorder %s144, %s160
      %p162 = scmp.eq.s32.totalorder %s21, 0
      %p163 = por %p161, %p162
      %p164 = scmp.le.s32.totalorder 1, %s15
      %p165 = scmp.lt.s32.totalorder %s15, 3
      %p166 = pnand %p164, %p165
      %p167 = pneg %p166
      // Predicated region
      $region9: #{tpu_custom_call.1} parent=5 // pred_check
        _
      $region10: #{tpu_custom_call.1} parent=5 // pred_check_branch
        %169 = sbr.rel (%p166) target = $region12
      $region11: #{tpu_custom_call.1} parent=5 // pred_region
        %s170 = ssub.s32 %s15, 1
        // Predicated region
        $region13: #{tpu_custom_call.1} parent=11 // pred_check
          %p171 = pneg %p62
        $region14: #{tpu_custom_call.1} parent=11 // pred_check_branch
          %173 = sbr.rel (%p171) target = $region16
        $region15: #{tpu_custom_call.1} parent=11 // pred_region
          _
        $region16: #{tpu_custom_call.1} parent=11 // pred_fallthru
          _
        // Predicated region
        $region17: #{tpu_custom_call.1} parent=11 // pred_check
          %p174 = pneg %p83
        $region18: #{tpu_custom_call.1} parent=11 // pred_check_branch
          %176 = sbr.rel (%p174) target = $region20
        $region19: #{tpu_custom_call.1} parent=11 // pred_region
          _
        $region20: #{tpu_custom_call.1} parent=11 // pred_fallthru
          _
        // Predicated region
        $region21: #{tpu_custom_call.1} parent=11 // pred_check
          %p177 = pneg %p104
        $region22: #{tpu_custom_call.1} parent=11 // pred_check_branch
          %179 = sbr.rel (%p177) target = $region24
        $region23: #{tpu_custom_call.1} parent=11 // pred_region
          _
        $region24: #{tpu_custom_call.1} parent=11 // pred_fallthru
          _
      $region12: #{tpu_custom_call.1} parent=5 // pred_fallthru
        _
      %p180 = scmp.lt.s32.totalorder %s15, 2
      // Predicated region
      $region25: #{tpu_custom_call.1} parent=5 // pred_check
        %p181 = pneg %p180
      $region26: #{tpu_custom_call.1} parent=5 // pred_check_branch
        %183 = sbr.rel (%p181) target = $region28
      $region27: #{tpu_custom_call.1} parent=5 // pred_region
        // Predicated region
        $region29: #{tpu_custom_call.1} parent=27 // pred_check
          %p184 = pneg %p35
        $region30: #{tpu_custom_call.1} parent=27 // pred_check_branch
          %186 = sbr.rel (%p184) target = $region32
        $region31: #{tpu_custom_call.1} parent=27 // pred_region
          %p187 = scmp.lt.s32.totalorder %s15, 1
          %s188 = scalar_select %p187, %s15, 1
          %s189 = smul.addr %s188, 6
          %s190 = smul.addr %s189, 8
          %s191 = scalar_lea.vmem %s0, %s190
        $region32: #{tpu_custom_call.1} parent=27 // pred_fallthru
          _
      $region28: #{tpu_custom_call.1} parent=5 // pred_fallthru
        _
      %p192 = scmp.le.s32.totalorder 1, %s15
      %p193 = scmp.lt.s32.totalorder %s15, 3
      %p194 = pnand %p192, %p193
      %p195 = pneg %p194
      // Predicated region
      $region33: #{tpu_custom_call.1} parent=5 // pred_check
        _
      $region34: #{tpu_custom_call.1} parent=5 // pred_check_branch
        %197 = sbr.rel (%p194) target = $region36
      $region35: #{tpu_custom_call.1} parent=5 // pred_region
        %s198 = ssub.s32 %s15, 1
        %p199 = scmp.lt.s32.totalorder %s20, 1
        %s200 = scalar_select %p199, %s20, 1
        %s201 = smul.addr %s200, 6
        %s202 = smul.addr %s201, 8
        %s203 = scalar_lea.vmem %s0, %s202
        %p204 = pneg %p41
        %p205 = pneg %p38
        %p206 = pneg %p62
        %p207 = pneg %p59
        %p208 = pneg %p83
        %p209 = pneg %p80
        %p210 = pneg %p104
        %p211 = pneg %p101
        %p212 = pneg %p130
        %p213 = pneg %p127
        %s214 = sand.u32 %s117, 1
        %s215 = scalar_lea.sflag [#allocation3], %s214
        %s216 = sand.u32 %s117, 1
        %s217 = smul.addr %s216, 672
        %s218 = scalar_lea.vmem [#allocation2], %s217
        %p219 = pneg %p156
        %p220 = pneg %p153
        %p221 = scmp.lt.s32.totalorder %s20, 1
        %s222 = scalar_select %p221, %s20, 1
        %s223 = smul.addr %s222, 4
        %s224 = scalar_lea.vmem %s5, %s223
        %p225 = scmp.lt.s32.totalorder %s20, 1
        %s226 = scalar_select %p225, %s20, 1
        %s227 = smul.addr %s226, 6
        %s228 = smul.addr %s227, 8
        %s229 = scalar_lea.vmem %s0, %s228
        %p230 = scmp.lt.s32.totalorder %s20, 1
        %s231 = scalar_select %p230, %s20, 1
        %s232 = smul.addr %s231, 4
        %s233 = scalar_lea.vmem %s5, %s232
        %v234 = vld [vmem:[%s229] sm:$0xff]
        %v235 = vld [vmem:[%s229 + $0x8] sm:$0xff]
        %v236 = vld [vmem:[%s229 + $0x10] sm:$0xff]
        %v237 = vld [vmem:[%s229 + $0x18] sm:$0xff]
        %v238 = vld [vmem:[%s229 + $0x20] sm:$0xff]
        %v239 = vld [vmem:[%s229 + $0x28] sm:$0xff]
        %v240 = vmax.f32 %v234, 0.0
        %v241 = vmax.f32 %v235, 0.0
        %v242 = vmax.f32 %v236, 0.0
        %v243 = vmax.f32 %v237, 0.0
        %v244 = vmax.f32 %v238, 0.0
        %v245 = vmax.f32 %v239, 0.0
        %v246 = vmin.f32 %v240, 1.0
        %v247 = vmin.f32 %v241, 1.0
        %v248 = vmin.f32 %v242, 1.0
        %v249 = vmin.f32 %v243, 1.0
        %v250 = vmin.f32 %v244, 1.0
        %v251 = vmin.f32 %v245, 1.0
        %v252 = vld [vmem:[%s2] sm:$0xff]
        %v253 = vld [vmem:[%s2 + $0x8] sm:$0xff]
        %v254 = vld [vmem:[%s2 + $0x10] sm:$0xff]
        %v255 = vld [vmem:[%s2 + $0x18] sm:$0xff]
        %vm256 = vcmask 130048
        %v258 = vsel %vm256, %v246, 0
        %v261 = vsel %vm256, %v247, 0
        %v264 = vsel %vm256, %v248, 0
        %v267 = vsel %vm256, %v249, 0
        %v270 = vsel %vm256, %v250, 0
        %v273 = vsel %vm256, %v251, 0
        %275 = vmatprep.subr.mxu0 %v253
        %276 = vmatpush1.msra.mxu0 %v252
        %277 = vmatprep.subr.mxu0 %v255
        %278 = vmatpush1.msra.mxu0 %v254
        %279 = vmatprep.subr.mxu0 0.0
        %280 = vmatpush1.msra.mxu0 0.0
        %281 = vmatprep.subr.mxu0 0.0
        %282 = vmatpush1.msra.mxu0 0.0
        %283 = vmatprep.subr.mxu0 0.0
        %284 = vmatpush1.msra.mxu0 0.0
        %285 = vmatprep.subr.mxu0 0.0
        %286 = vmatpush1.msra.mxu0 0.0
        %287 = vmatprep.subr.mxu0 0.0
        %288 = vmatpush1.msra.mxu0 0.0
        %289 = vmatprep.subr.mxu0 0.0
        %290 = vmatpush1.msra.mxu0 0.0
        %291 = vmatprep.subr.mxu0 0.0
        %292 = vmatpush1.msra.mxu0 0.0
        %293 = vmatprep.subr.mxu0 0.0
        %294 = vmatpush1.msra.mxu0 0.0
        %295 = vmatprep.subr.mxu0 0.0
        %296 = vmatpush1.msra.mxu0 0.0
        %297 = vmatprep.subr.mxu0 0.0
        %298 = vmatpush1.msra.mxu0 0.0
        %299 = vmatprep.subr.mxu0 0.0
        %300 = vmatpush1.msra.mxu0 0.0
        %301 = vmatprep.subr.mxu0 0.0
        %302 = vmatpush1.msra.mxu0 0.0
        %303 = vmatprep.subr.mxu0 0.0
        %304 = vmatpush1.msra.mxu0 0.0
        %305 = vmatprep.subr.mxu0 0.0
        %306 = vmatpush1.msra.mxu0 0.0
        %307 = vmatprep.subr.mxu0 0.0
        %308 = vmatpush1.msra.mxu0 0.0
        %309 = vmatprep.subr.mxu0 0.0
        %310 = vmatpush1.msra.mxu0 0.0
        %311 = vmatprep.subr.mxu0 0.0
        %312 = vmatpush1.msra.mxu0 0.0
        %313 = vmatprep.subr.mxu0 0.0
        %314 = vmatpush1.msra.mxu0 0.0
        %315 = vmatprep.subr.mxu0 0.0
        %316 = vmatpush1.msra.mxu0 0.0
        %317 = vmatprep.subr.mxu0 0.0
        %318 = vmatpush1.msra.mxu0 0.0
        %319 = vmatprep.subr.mxu0 0.0
        %320 = vmatpush1.msra.mxu0 0.0
        %321 = vmatprep.subr.mxu0 0.0
        %322 = vmatpush1.msra.mxu0 0.0
        %323 = vmatprep.subr.mxu0 0.0
        %324 = vmatpush1.msra.mxu0 0.0
        %325 = vmatprep.subr.mxu0 0.0
        %326 = vmatpush1.msra.mxu0 0.0
        %327 = vmatprep.subr.mxu0 0.0
        %328 = vmatpush1.msra.mxu0 0.0
        %329 = vmatprep.subr.mxu0 0.0
        %330 = vmatpush1.msra.mxu0 0.0
        %331 = vmatprep.subr.mxu0 0.0
        %332 = vmatpush1.msra.mxu0 0.0
        %333 = vmatprep.subr.mxu0 0.0
        %334 = vmatpush1.msra.mxu0 0.0
        %335 = vmatprep.subr.mxu0 0.0
        %336 = vmatpush1.msra.mxu0 0.0
        %337 = vmatprep.subr.mxu0 0.0
        %338 = vmatpush1.msra.mxu0 0.0
        %339 = vmatprep.mubr.f32.mxu0 0.0
        %340 = vmatmul.mubr.f32.gmra.mrb[0].mxu0 %v258
        %v341 = vpop.f32.mrb[0].mxu0
        %v342 = vadd.f32 0.0, %v341
        %v343 = vpop.f32.mrb[0].mxu0
        %v344 = vadd.f32 0.0, %v343
        %345 = vmatprep.mubr.f32.mxu0 0.0
        %346 = vmatmul.mubr.f32.gmra.mrb[0].mxu0 %v261
        %v347 = vpop.f32.mrb[0].mxu0
        %v348 = vadd.f32 0.0, %v347
        %v349 = vpop.f32.mrb[0].mxu0
        %v350 = vadd.f32 0.0, %v349
        %351 = vmatprep.mubr.f32.mxu0 0.0
        %352 = vmatmul.mubr.f32.gmra.mrb[0].mxu0 %v264
        %v353 = vpop.f32.mrb[0].mxu0
        %v354 = vadd.f32 0.0, %v353
        %v355 = vpop.f32.mrb[0].mxu0
        %v356 = vadd.f32 0.0, %v355
        %357 = vmatprep.mubr.f32.mxu0 0.0
        %358 = vmatmul.mubr.f32.gmra.mrb[0].mxu0 %v267
        %v359 = vpop.f32.mrb[0].mxu0
        %v360 = vadd.f32 0.0, %v359
        %v361 = vpop.f32.mrb[0].mxu0
        %v362 = vadd.f32 0.0, %v361
        %363 = vmatprep.mubr.f32.mxu0 0.0
        %364 = vmatmul.mubr.f32.gmra.mrb[0].mxu0 %v270
        %v365 = vpop.f32.mrb[0].mxu0
        %v366 = vadd.f32 0.0, %v365
        %v367 = vpop.f32.mrb[0].mxu0
        %v368 = vadd.f32 0.0, %v367
        %369 = vmatprep.mubr.f32.mxu0 0.0
        %370 = vmatmul.mubr.f32.gmra.mrb[0].mxu0 %v273
        %v371 = vpop.f32.mrb[0].mxu0
        %v372 = vadd.f32 0.0, %v371
        %v373 = vpop.f32.mrb[0].mxu0
        %v374 = vadd.f32 0.0, %v373
        %375 = vdwg.mxu0
        %v376 = vld [vmem:[%s1] sm:$0xff]
        %v377 = vld [vmem:[%s1 + $0x8] sm:$0xff]
        %v378 = vld [vmem:[%s1 + $0x10] sm:$0xff]
        %v379 = vld [vmem:[%s1 + $0x18] sm:$0xff]
        %v380 = vld [vmem:[%s1 + $0x20] sm:$0xff]
        %v381 = vld [vmem:[%s1 + $0x28] sm:$0xff]
        %v382 = vld [vmem:[%s1 + $0x30] sm:$0xff]
        %v383 = vld [vmem:[%s1 + $0x38] sm:$0xff]
        %v384 = vld [vmem:[%s1 + $0x40] sm:$0xff]
        %v385 = vld [vmem:[%s1 + $0x48] sm:$0xff]
        %v386 = vld [vmem:[%s1 + $0x50] sm:$0xff]
        %v387 = vld [vmem:[%s1 + $0x58] sm:$0xff]
        %v388 = vld [vmem:[%s1 + $0x60] sm:$0xff]
        %v389 = vld [vmem:[%s1 + $0x68] sm:$0xff]
        %v390 = vld [vmem:[%s1 + $0x70] sm:$0xff]
        %v391 = vld [vmem:[%s1 + $0x78] sm:$0xff]
        %v392 = vld [vmem:[%s1 + $0x80] sm:$0xff]
        %v393 = vld [vmem:[%s1 + $0x88] sm:$0xff]
        %v394 = vld [vmem:[%s1 + $0x90] sm:$0xff]
        %v395 = vld [vmem:[%s1 + $0x98] sm:$0xff]
        %v396 = vld [vmem:[%s1 + $0xa0] sm:$0xff]
        %v397 = vld [vmem:[%s1 + $0xa8] sm:$0xff]
        %v398 = vld [vmem:[%s1 + $0xb0] sm:$0xff]
        %v399 = vld [vmem:[%s1 + $0xb8] sm:$0xff]
        %v400 = vld [vmem:[%s1 + $0xc0] sm:$0xff]
        %v401 = vld [vmem:[%s1 + $0xc8] sm:$0xff]
        %v402 = vld [vmem:[%s1 + $0xd0] sm:$0xff]
        %v403 = vld [vmem:[%s1 + $0xd8] sm:$0xff]
        %v404 = vld [vmem:[%s1 + $0xe0] sm:$0xff]
        %v405 = vld [vmem:[%s1 + $0xe8] sm:$0xff]
        %v406 = vld [vmem:[%s1 + $0xf0] sm:$0xff]
        %v407 = vld [vmem:[%s1 + $0xf8] sm:$0xff]
        %v408 = vld [vmem:[%s1 + $0x100] sm:$0xff]
        %v409 = vld [vmem:[%s1 + $0x108] sm:$0xff]
        %v410 = vld [vmem:[%s1 + $0x110] sm:$0xff]
        %v411 = vld [vmem:[%s1 + $0x118] sm:$0xff]
        %v412 = vld [vmem:[%s1 + $0x120] sm:$0xff]
        %v413 = vld [vmem:[%s1 + $0x128] sm:$0xff]
        %v414 = vld [vmem:[%s1 + $0x130] sm:$0xff]
        %v415 = vld [vmem:[%s1 + $0x138] sm:$0xff]
        %v416 = vld [vmem:[%s1 + $0x140] sm:$0xff]
        %v417 = vld [vmem:[%s1 + $0x148] sm:$0xff]
        %v418 = vld [vmem:[%s1 + $0x150] sm:$0xff]
        %v419 = vld [vmem:[%s1 + $0x158] sm:$0xff]
        %v420 = vld [vmem:[%s1 + $0x160] sm:$0xff]
        %v421 = vld [vmem:[%s1 + $0x168] sm:$0xff]
        %v422 = vld [vmem:[%s1 + $0x170] sm:$0xff]
        %v423 = vld [vmem:[%s1 + $0x178] sm:$0xff]
        %v424 = vld [vmem:[%s1 + $0x180] sm:$0xff]
        %v425 = vld [vmem:[%s1 + $0x188] sm:$0xff]
        %v426 = vld [vmem:[%s1 + $0x190] sm:$0xff]
        %v427 = vld [vmem:[%s1 + $0x198] sm:$0xff]
        %v428 = vld [vmem:[%s1 + $0x1a0] sm:$0xff]
        %v429 = vld [vmem:[%s1 + $0x1a8] sm:$0xff]
        %v430 = vld [vmem:[%s1 + $0x1b0] sm:$0xff]
        %v431 = vld [vmem:[%s1 + $0x1b8] sm:$0xff]
        %v432 = vld [vmem:[%s1 + $0x1c0] sm:$0xff]
        %v433 = vld [vmem:[%s1 + $0x1c8] sm:$0xff]
        %v434 = vld [vmem:[%s1 + $0x1d0] sm:$0xff]
        %v435 = vld [vmem:[%s1 + $0x1d8] sm:$0xff]
        %v436 = vld [vmem:[%s1 + $0x1e0] sm:$0xff]
        %v437 = vld [vmem:[%s1 + $0x1e8] sm:$0xff]
        %v438 = vld [vmem:[%s1 + $0x1f0] sm:$0xff]
        %v439 = vld [vmem:[%s1 + $0x1f8] sm:$0xff]
        %v440 = vld [vmem:[%s1 + $0x200] sm:$0xff]
        %v441 = vld [vmem:[%s1 + $0x208] sm:$0xff]
        %v442 = vld [vmem:[%s1 + $0x210] sm:$0xff]
        %v443 = vld [vmem:[%s1 + $0x218] sm:$0xff]
        %v444 = vld [vmem:[%s1 + $0x220] sm:$0xff]
        %v445 = vld [vmem:[%s1 + $0x228] sm:$0xff]
        %v446 = vld [vmem:[%s1 + $0x230] sm:$0xff]
        %v447 = vld [vmem:[%s1 + $0x238] sm:$0xff]
        %v448 = vld [vmem:[%s1 + $0x240] sm:$0xff]
        %v449 = vld [vmem:[%s1 + $0x248] sm:$0xff]
        %v450 = vld [vmem:[%s1 + $0x250] sm:$0xff]
        %v451 = vld [vmem:[%s1 + $0x258] sm:$0xff]
        %v452 = vld [vmem:[%s1 + $0x260] sm:$0xff]
        %v453 = vld [vmem:[%s1 + $0x268] sm:$0xff]
        %v454 = vld [vmem:[%s1 + $0x270] sm:$0xff]
        %v455 = vld [vmem:[%s1 + $0x278] sm:$0xff]
        %v456 = vld [vmem:[%s1 + $0x280] sm:$0xff]
        %v457 = vld [vmem:[%s1 + $0x288] sm:$0xff]
        %v458 = vld [vmem:[%s1 + $0x290] sm:$0xff]
        %v459 = vld [vmem:[%s1 + $0x298] sm:$0xff]
        %v461 = vsel %vm256, %v376, 0
        %v464 = vsel %vm256, %v377, 0
        %v467 = vsel %vm256, %v378, 0
        %v470 = vsel %vm256, %v379, 0
        %v473 = vsel %vm256, %v380, 0
        %v476 = vsel %vm256, %v381, 0
        %v479 = vsel %vm256, %v382, 0
        %v482 = vsel %vm256, %v383, 0
        %v485 = vsel %vm256, %v384, 0
        %v488 = vsel %vm256, %v385, 0
        %v491 = vsel %vm256, %v386, 0
        %v494 = vsel %vm256, %v387, 0
        %v497 = vsel %vm256, %v388, 0
        %v500 = vsel %vm256, %v389, 0
        %v503 = vsel %vm256, %v390, 0
        %v506 = vsel %vm256, %v391, 0
        %v509 = vsel %vm256, %v392, 0
        %v512 = vsel %vm256, %v393, 0
        %v515 = vsel %vm256, %v394, 0
        %v518 = vsel %vm256, %v395, 0
        %v521 = vsel %vm256, %v396, 0
        %v524 = vsel %vm256, %v397, 0
        %v527 = vsel %vm256, %v398, 0
        %v530 = vsel %vm256, %v399, 0
        %v533 = vsel %vm256, %v400, 0
        %v536 = vsel %vm256, %v401, 0
        %v539 = vsel %vm256, %v402, 0
        %v542 = vsel %vm256, %v403, 0
        %544 = vmatprep.subr.mxu0 %v344
        %545 = vmatpush1.msra.mxu0 %v342
        %546 = vmatprep.subr.mxu0 %v350
        %547 = vmatpush1.msra.mxu0 %v348
        %548 = vmatprep.subr.mxu0 0.0
        %549 = vmatpush1.msra.mxu0 0.0
        %550 = vmatprep.subr.mxu0 0.0
        %551 = vmatpush1.msra.mxu0 0.0
        %552 = vmatprep.subr.mxu0 0.0
        %553 = vmatpush1.msra.mxu0 0.0
        %554 = vmatprep.subr.mxu0 0.0
        %555 = vmatpush1.msra.mxu0 0.0
        %556 = vmatprep.subr.mxu0 0.0
        %557 = vmatpush1.msra.mxu0 0.0
        %558 = vmatprep.subr.mxu0 0.0
        %559 = vmatpush1.msra.mxu0 0.0
        %560 = vmatprep.subr.mxu0 0.0
        %561 = vmatpush1.msra.mxu0 0.0
        %562 = vmatprep.subr.mxu0 0.0
        %563 = vmatpush1.msra.mxu0 0.0
        %564 = vmatprep.subr.mxu0 0.0
        %565 = vmatpush1.msra.mxu0 0.0
        %566 = vmatprep.subr.mxu0 0.0
        %567 = vmatpush1.msra.mxu0 0.0
        %568 = vmatprep.subr.mxu0 0.0
        %569 = vmatpush1.msra.mxu0 0.0
        %570 = vmatprep.subr.mxu0 0.0
        %571 = vmatpush1.msra.mxu0 0.0
        %572 = vmatprep.subr.mxu0 0.0
        %573 = vmatpush1.msra.mxu0 0.0
        %574 = vmatprep.subr.mxu0 0.0
        %575 = vmatpush1.msra.mxu0 0.0
        %576 = vmatprep.subr.mxu0 0.0
        %577 = vmatpush1.msra.mxu0 0.0
        %578 = vmatprep.subr.mxu0 0.0
        %579 = vmatpush1.msra.mxu0 0.0
        %580 = vmatprep.subr.mxu0 0.0
        %581 = vmatpush1.msra.mxu0 0.0
        %582 = vmatprep.subr.mxu0 0.0
        %583 = vmatpush1.msra.mxu0 0.0
        %584 = vmatprep.subr.mxu0 0.0
        %585 = vmatpush1.msra.mxu0 0.0
        %586 = vmatprep.subr.mxu0 0.0
        %587 = vmatpush1.msra.mxu0 0.0
        %588 = vmatprep.subr.mxu0 0.0
        %589 = vmatpush1.msra.mxu0 0.0
        %590 = vmatprep.subr.mxu0 0.0
        %591 = vmatpush1.msra.mxu0 0.0
        %592 = vmatprep.subr.mxu0 0.0
        %593 = vmatpush1.msra.mxu0 0.0
        %594 = vmatprep.subr.mxu0 0.0
        %595 = vmatpush1.msra.mxu0 0.0
        %596 = vmatprep.subr.mxu0 0.0
        %597 = vmatpush1.msra.mxu0 0.0
        %598 = vmatprep.subr.mxu0 0.0
        %599 = vmatpush1.msra.mxu0 0.0
        %600 = vmatprep.subr.mxu0 0.0
        %601 = vmatpush1.msra.mxu0 0.0
        %602 = vmatprep.subr.mxu0 0.0
        %603 = vmatpush1.msra.mxu0 0.0
        %604 = vmatprep.subr.mxu0 0.0
        %605 = vmatpush1.msra.mxu0 0.0
        %606 = vmatprep.subr.mxu0 0.0
        %607 = vmatpush1.msra.mxu0 0.0
        %608 = vmatprep.mubr.f32.mxu0 0.0
        %609 = vmatmul.mubr.f32.gmra.mrb[0].mxu0 %v461
        %v610 = vpop.f32.mrb[0].mxu0
        %v611 = vadd.f32 0.0, %v610
        %v612 = vpop.f32.mrb[0].mxu0
        %v613 = vadd.f32 0.0, %v612
        %614 = vmatprep.mubr.f32.mxu0 0.0
        %615 = vmatmul.mubr.f32.gmra.mrb[0].mxu0 %v464
        %v616 = vpop.f32.mrb[0].mxu0
        %v617 = vadd.f32 0.0, %v616
        %v618 = vpop.f32.mrb[0].mxu0
        %v619 = vadd.f32 0.0, %v618
        %620 = vmatprep.mubr.f32.mxu0 0.0
        %621 = vmatmul.mubr.f32.gmra.mrb[0].mxu0 %v467
        %v622 = vpop.f32.mrb[0].mxu0
        %v623 = vadd.f32 0.0, %v622
        %v624 = vpop.f32.mrb[0].mxu0
        %v625 = vadd.f32 0.0, %v624
        %626 = vmatprep.mubr.f32.mxu0 0.0
        %627 = vmatmul.mubr.f32.gmra.mrb[0].mxu0 %v470
        %v628 = vpop.f32.mrb[0].mxu0
        %v629 = vadd.f32 0.0, %v628
        %v630 = vpop.f32.mrb[0].mxu0
        %v631 = vadd.f32 0.0, %v630
        %632 = vmatprep.mubr.f32.mxu0 0.0
        %633 = vmatmul.mubr.f32.gmra.mrb[0].mxu0 %v473
        %v634 = vpop.f32.mrb[0].mxu0
        %v635 = vadd.f32 0.0, %v634
        %v636 = vpop.f32.mrb[0].mxu0
        %v637 = vadd.f32 0.0, %v636
        %638 = vmatprep.mubr.f32.mxu0 0.0
        %639 = vmatmul.mubr.f32.gmra.mrb[0].mxu0 %v476
        %v640 = vpop.f32.mrb[0].mxu0
        %v641 = vadd.f32 0.0, %v640
        %v642 = vpop.f32.mrb[0].mxu0
        %v643 = vadd.f32 0.0, %v642
        %644 = vmatprep.mubr.f32.mxu0 0.0
        %645 = vmatmul.mubr.f32.gmra.mrb[0].mxu0 %v479
        %v646 = vpop.f32.mrb[0].mxu0
        %v647 = vadd.f32 0.0, %v646
        %v648 = vpop.f32.mrb[0].mxu0
        %v649 = vadd.f32 0.0, %v648
        %650 = vmatprep.mubr.f32.mxu0 0.0
        %651 = vmatmul.mubr.f32.gmra.mrb[0].mxu0 %v482
        %v652 = vpop.f32.mrb[0].mxu0
        %v653 = vadd.f32 0.0, %v652
        %v654 = vpop.f32.mrb[0].mxu0
        %v655 = vadd.f32 0.0, %v654
        %656 = vmatprep.mubr.f32.mxu0 0.0
        %657 = vmatmul.mubr.f32.gmra.mrb[0].mxu0 %v485
        %v658 = vpop.f32.mrb[0].mxu0
        %v659 = vadd.f32 0.0, %v658
        %v660 = vpop.f32.mrb[0].mxu0
        %v661 = vadd.f32 0.0, %v660
        %662 = vmatprep.mubr.f32.mxu0 0.0
        %663 = vmatmul.mubr.f32.gmra.mrb[0].mxu0 %v488
        %v664 = vpop.f32.mrb[0].mxu0
        %v665 = vadd.f32 0.0, %v664
        %v666 = vpop.f32.mrb[0].mxu0
        %v667 = vadd.f32 0.0, %v666
        %668 = vmatprep.mubr.f32.mxu0 0.0
        %669 = vmatmul.mubr.f32.gmra.mrb[0].mxu0 %v491
        %v670 = vpop.f32.mrb[0].mxu0
        %v671 = vadd.f32 0.0, %v670
        %v672 = vpop.f32.mrb[0].mxu0
        %v673 = vadd.f32 0.0, %v672
        %674 = vmatprep.mubr.f32.mxu0 0.0
        %675 = vmatmul.mubr.f32.gmra.mrb[0].mxu0 %v494
        %v676 = vpop.f32.mrb[0].mxu0
        %v677 = vadd.f32 0.0, %v676
        %v678 = vpop.f32.mrb[0].mxu0
        %v679 = vadd.f32 0.0, %v678
        %680 = vmatprep.mubr.f32.mxu0 0.0
        %681 = vmatmul.mubr.f32.gmra.mrb[0].mxu0 %v497
        %v682 = vpop.f32.mrb[0].mxu0
        %v683 = vadd.f32 0.0, %v682
        %v684 = vpop.f32.mrb[0].mxu0
        %v685 = vadd.f32 0.0, %v684
        %686 = vmatprep.mubr.f32.mxu0 0.0
        %687 = vmatmul.mubr.f32.gmra.mrb[0].mxu0 %v500
        %v688 = vpop.f32.mrb[0].mxu0
        %v689 = vadd.f32 0.0, %v688
        %v690 = vpop.f32.mrb[0].mxu0
        %v691 = vadd.f32 0.0, %v690
        %692 = vmatprep.mubr.f32.mxu0 0.0
        %693 = vmatmul.mubr.f32.gmra.mrb[0].mxu0 %v503
        %v694 = vpop.f32.mrb[0].mxu0
        %v695 = vadd.f32 0.0, %v694
        %v696 = vpop.f32.mrb[0].mxu0
        %v697 = vadd.f32 0.0, %v696
        %698 = vmatprep.mubr.f32.mxu0 0.0
        %699 = vmatmul.mubr.f32.gmra.mrb[0].mxu0 %v506
        %v700 = vpop.f32.mrb[0].mxu0
        %v701 = vadd.f32 0.0, %v700
        %v702 = vpop.f32.mrb[0].mxu0
        %v703 = vadd.f32 0.0, %v702
        %704 = vmatprep.mubr.f32.mxu0 0.0
        %705 = vmatmul.mubr.f32.gmra.mrb[0].mxu0 %v509
        %v706 = vpop.f32.mrb[0].mxu0
        %v707 = vadd.f32 0.0, %v706
        %v708 = vpop.f32.mrb[0].mxu0
        %v709 = vadd.f32 0.0, %v708
        %710 = vmatprep.mubr.f32.mxu0 0.0
        %711 = vmatmul.mubr.f32.gmra.mrb[0].mxu0 %v512
        %v712 = vpop.f32.mrb[0].mxu0
        %v713 = vadd.f32 0.0, %v712
        %v714 = vpop.f32.mrb[0].mxu0
        %v715 = vadd.f32 0.0, %v714
        %716 = vmatprep.mubr.f32.mxu0 0.0
        %717 = vmatmul.mubr.f32.gmra.mrb[0].mxu0 %v515
        %v718 = vpop.f32.mrb[0].mxu0
        %v719 = vadd.f32 0.0, %v718
        %v720 = vpop.f32.mrb[0].mxu0
        %v721 = vadd.f32 0.0, %v720
        %722 = vmatprep.mubr.f32.mxu0 0.0
        %723 = vmatmul.mubr.f32.gmra.mrb[0].mxu0 %v518
        %v724 = vpop.f32.mrb[0].mxu0
        %v725 = vadd.f32 0.0, %v724
        %v726 = vpop.f32.mrb[0].mxu0
        %v727 = vadd.f32 0.0, %v726
        %728 = vmatprep.mubr.f32.mxu0 0.0
        %729 = vmatmul.mubr.f32.gmra.mrb[0].mxu0 %v521
        %v730 = vpop.f32.mrb[0].mxu0
        %v731 = vadd.f32 0.0, %v730
        %v732 = vpop.f32.mrb[0].mxu0
        %v733 = vadd.f32 0.0, %v732
        %734 = vmatprep.mubr.f32.mxu0 0.0
        %735 = vmatmul.mubr.f32.gmra.mrb[0].mxu0 %v524
        %v736 = vpop.f32.mrb[0].mxu0
        %v737 = vadd.f32 0.0, %v736
        %v738 = vpop.f32.mrb[0].mxu0
        %v739 = vadd.f32 0.0, %v738
        %740 = vmatprep.mubr.f32.mxu0 0.0
        %741 = vmatmul.mubr.f32.gmra.mrb[0].mxu0 %v527
        %v742 = vpop.f32.mrb[0].mxu0
        %v743 = vadd.f32 0.0, %v742
        %v744 = vpop.f32.mrb[0].mxu0
        %v745 = vadd.f32 0.0, %v744
        %746 = vmatprep.mubr.f32.mxu0 0.0
        %747 = vmatmul.mubr.f32.gmra.mrb[0].mxu0 %v530
        %v748 = vpop.f32.mrb[0].mxu0
        %v749 = vadd.f32 0.0, %v748
        %v750 = vpop.f32.mrb[0].mxu0
        %v751 = vadd.f32 0.0, %v750
        %752 = vmatprep.mubr.f32.mxu0 0.0
        %753 = vmatmul.mubr.f32.gmra.mrb[0].mxu0 %v533
        %v754 = vpop.f32.mrb[0].mxu0
        %v755 = vadd.f32 0.0, %v754
        %v756 = vpop.f32.mrb[0].mxu0
        %v757 = vadd.f32 0.0, %v756
        %758 = vmatprep.mubr.f32.mxu0 0.0
        %759 = vmatmul.mubr.f32.gmra.mrb[0].mxu0 %v536
        %v760 = vpop.f32.mrb[0].mxu0
        %v761 = vadd.f32 0.0, %v760
        %v762 = vpop.f32.mrb[0].mxu0
        %v763 = vadd.f32 0.0, %v762
        %764 = vmatprep.mubr.f32.mxu0 0.0
        %765 = vmatmul.mubr.f32.gmra.mrb[0].mxu0 %v539
        %v766 = vpop.f32.mrb[0].mxu0
        %v767 = vadd.f32 0.0, %v766
        %v768 = vpop.f32.mrb[0].mxu0
        %v769 = vadd.f32 0.0, %v768
        %770 = vmatprep.mubr.f32.mxu0 0.0
        %771 = vmatmul.mubr.f32.gmra.mrb[0].mxu0 %v542
        %v772 = vpop.f32.mrb[0].mxu0
        %v773 = vadd.f32 0.0, %v772
        %v774 = vpop.f32.mrb[0].mxu0
        %v775 = vadd.f32 0.0, %v774
        %776 = vdwg.mxu0
        %v778 = vsel %vm256, %v404, 0
        %v781 = vsel %vm256, %v405, 0
        %v784 = vsel %vm256, %v406, 0
        %v787 = vsel %vm256, %v407, 0
        %v790 = vsel %vm256, %v408, 0
        %v793 = vsel %vm256, %v409, 0
        %v796 = vsel %vm256, %v410, 0
        %v799 = vsel %vm256, %v411, 0
        %v802 = vsel %vm256, %v412, 0
        %v805 = vsel %vm256, %v413, 0
        %v808 = vsel %vm256, %v414, 0
        %v811 = vsel %vm256, %v415, 0
        %v814 = vsel %vm256, %v416, 0
        %v817 = vsel %vm256, %v417, 0
        %v820 = vsel %vm256, %v418, 0
        %v823 = vsel %vm256, %v419, 0
        %v826 = vsel %vm256, %v420, 0
        %v829 = vsel %vm256, %v421, 0
        %v832 = vsel %vm256, %v422, 0
        %v835 = vsel %vm256, %v423, 0
        %v838 = vsel %vm256, %v424, 0
        %v841 = vsel %vm256, %v425, 0
        %v844 = vsel %vm256, %v426, 0
        %v847 = vsel %vm256, %v427, 0
        %v850 = vsel %vm256, %v428, 0
        %v853 = vsel %vm256, %v429, 0
        %v856 = vsel %vm256, %v430, 0
        %v859 = vsel %vm256, %v431, 0
        %861 = vmatprep.subr.mxu0 %v356
        %862 = vmatpush1.msra.mxu0 %v354
        %863 = vmatprep.subr.mxu0 %v362
        %864 = vmatpush1.msra.mxu0 %v360
        %865 = vmatprep.subr.mxu0 0.0
        %866 = vmatpush1.msra.mxu0 0.0
        %867 = vmatprep.subr.mxu0 0.0
        %868 = vmatpush1.msra.mxu0 0.0
        %869 = vmatprep.subr.mxu0 0.0
        %870 = vmatpush1.msra.mxu0 0.0
        %871 = vmatprep.subr.mxu0 0.0
        %872 = vmatpush1.msra.mxu0 0.0
        %873 = vmatprep.subr.mxu0 0.0
        %874 = vmatpush1.msra.mxu0 0.0
        %875 = vmatprep.subr.mxu0 0.0
        %876 = vmatpush1.msra.mxu0 0.0
        %877 = vmatprep.subr.mxu0 0.0
        %878 = vmatpush1.msra.mxu0 0.0
        %879 = vmatprep.subr.mxu0 0.0
        %880 = vmatpush1.msra.mxu0 0.0
        %881 = vmatprep.subr.mxu0 0.0
        %882 = vmatpush1.msra.mxu0 0.0
        %883 = vmatprep.subr.mxu0 0.0
        %884 = vmatpush1.msra.mxu0 0.0
        %885 = vmatprep.subr.mxu0 0.0
        %886 = vmatpush1.msra.mxu0 0.0
        %887 = vmatprep.subr.mxu0 0.0
        %888 = vmatpush1.msra.mxu0 0.0
        %889 = vmatprep.subr.mxu0 0.0
        %890 = vmatpush1.msra.mxu0 0.0
        %891 = vmatprep.subr.mxu0 0.0
        %892 = vmatpush1.msra.mxu0 0.0
        %893 = vmatprep.subr.mxu0 0.0
        %894 = vmatpush1.msra.mxu0 0.0
        %895 = vmatprep.subr.mxu0 0.0
        %896 = vmatpush1.msra.mxu0 0.0
        %897 = vmatprep.subr.mxu0 0.0
        %898 = vmatpush1.msra.mxu0 0.0
        %899 = vmatprep.subr.mxu0 0.0
        %900 = vmatpush1.msra.mxu0 0.0
        %901 = vmatprep.subr.mxu0 0.0
        %902 = vmatpush1.msra.mxu0 0.0
        %903 = vmatprep.subr.mxu0 0.0
        %904 = vmatpush1.msra.mxu0 0.0
        %905 = vmatprep.subr.mxu0 0.0
        %906 = vmatpush1.msra.mxu0 0.0
        %907 = vmatprep.subr.mxu0 0.0
        %908 = vmatpush1.msra.mxu0 0.0
        %909 = vmatprep.subr.mxu0 0.0
        %910 = vmatpush1.msra.mxu0 0.0
        %911 = vmatprep.subr.mxu0 0.0
        %912 = vmatpush1.msra.mxu0 0.0
        %913 = vmatprep.subr.mxu0 0.0
        %914 = vmatpush1.msra.mxu0 0.0
        %915 = vmatprep.subr.mxu0 0.0
        %916 = vmatpush1.msra.mxu0 0.0
        %917 = vmatprep.subr.mxu0 0.0
        %918 = vmatpush1.msra.mxu0 0.0
        %919 = vmatprep.subr.mxu0 0.0
        %920 = vmatpush1.msra.mxu0 0.0
        %921 = vmatprep.subr.mxu0 0.0
        %922 = vmatpush1.msra.mxu0 0.0
        %923 = vmatprep.subr.mxu0 0.0
        %924 = vmatpush1.msra.mxu0 0.0
        %925 = vmatprep.mubr.f32.mxu0 0.0
        %926 = vmatmul.mubr.f32.gmra.mrb[0].mxu0 %v778
        %v927 = vpop.f32.mrb[0].mxu0
        %v928 = vadd.f32 0.0, %v927
        %v929 = vpop.f32.mrb[0].mxu0
        %v930 = vadd.f32 0.0, %v929
        %931 = vmatprep.mubr.f32.mxu0 0.0
        %932 = vmatmul.mubr.f32.gmra.mrb[0].mxu0 %v781
        %v933 = vpop.f32.mrb[0].mxu0
        %v934 = vadd.f32 0.0, %v933
        %v935 = vpop.f32.mrb[0].mxu0
        %v936 = vadd.f32 0.0, %v935
        %937 = vmatprep.mubr.f32.mxu0 0.0
        %938 = vmatmul.mubr.f32.gmra.mrb[0].mxu0 %v784
        %v939 = vpop.f32.mrb[0].mxu0
        %v940 = vadd.f32 0.0, %v939
        %v941 = vpop.f32.mrb[0].mxu0
        %v942 = vadd.f32 0.0, %v941
        %943 = vmatprep.mubr.f32.mxu0 0.0
        %944 = vmatmul.mubr.f32.gmra.mrb[0].mxu0 %v787
        %v945 = vpop.f32.mrb[0].mxu0
        %v946 = vadd.f32 0.0, %v945
        %v947 = vpop.f32.mrb[0].mxu0
        %v948 = vadd.f32 0.0, %v947
        %949 = vmatprep.mubr.f32.mxu0 0.0
        %950 = vmatmul.mubr.f32.gmra.mrb[0].mxu0 %v790
        %v951 = vpop.f32.mrb[0].mxu0
        %v952 = vadd.f32 0.0, %v951
        %v953 = vpop.f32.mrb[0].mxu0
        %v954 = vadd.f32 0.0, %v953
        %955 = vmatprep.mubr.f32.mxu0 0.0
        %956 = vmatmul.mubr.f32.gmra.mrb[0].mxu0 %v793
        %v957 = vpop.f32.mrb[0].mxu0
        %v958 = vadd.f32 0.0, %v957
        %v959 = vpop.f32.mrb[0].mxu0
        %v960 = vadd.f32 0.0, %v959
        %961 = vmatprep.mubr.f32.mxu0 0.0
        %962 = vmatmul.mubr.f32.gmra.mrb[0].mxu0 %v796
        %v963 = vpop.f32.mrb[0].mxu0
        %v964 = vadd.f32 0.0, %v963
        %v965 = vpop.f32.mrb[0].mxu0
        %v966 = vadd.f32 0.0, %v965
        %967 = vmatprep.mubr.f32.mxu0 0.0
        %968 = vmatmul.mubr.f32.gmra.mrb[0].mxu0 %v799
        %v969 = vpop.f32.mrb[0].mxu0
        %v970 = vadd.f32 0.0, %v969
        %v971 = vpop.f32.mrb[0].mxu0
        %v972 = vadd.f32 0.0, %v971
        %973 = vmatprep.mubr.f32.mxu0 0.0
        %974 = vmatmul.mubr.f32.gmra.mrb[0].mxu0 %v802
        %v975 = vpop.f32.mrb[0].mxu0
        %v976 = vadd.f32 0.0, %v975
        %v977 = vpop.f32.mrb[0].mxu0
        %v978 = vadd.f32 0.0, %v977
        %979 = vmatprep.mubr.f32.mxu0 0.0
        %980 = vmatmul.mubr.f32.gmra.mrb[0].mxu0 %v805
        %v981 = vpop.f32.mrb[0].mxu0
        %v982 = vadd.f32 0.0, %v981
        %v983 = vpop.f32.mrb[0].mxu0
        %v984 = vadd.f32 0.0, %v983
        %985 = vmatprep.mubr.f32.mxu0 0.0
        %986 = vmatmul.mubr.f32.gmra.mrb[0].mxu0 %v808
        %v987 = vpop.f32.mrb[0].mxu0
        %v988 = vadd.f32 0.0, %v987
        %v989 = vpop.f32.mrb[0].mxu0
        %v990 = vadd.f32 0.0, %v989
        %991 = vmatprep.mubr.f32.mxu0 0.0
        %992 = vmatmul.mubr.f32.gmra.mrb[0].mxu0 %v811
        %v993 = vpop.f32.mrb[0].mxu0
        %v994 = vadd.f32 0.0, %v993
        %v995 = vpop.f32.mrb[0].mxu0
        %v996 = vadd.f32 0.0, %v995
        %997 = vmatprep.mubr.f32.mxu0 0.0
        %998 = vmatmul.mubr.f32.gmra.mrb[0].mxu0 %v814
        %v999 = vpop.f32.mrb[0].mxu0
        %v1000 = vadd.f32 0.0, %v999
        %v1001 = vpop.f32.mrb[0].mxu0
        %v1002 = vadd.f32 0.0, %v1001
        %1003 = vmatprep.mubr.f32.mxu0 0.0
        %1004 = vmatmul.mubr.f32.gmra.mrb[0].mxu0 %v817
        %v1005 = vpop.f32.mrb[0].mxu0
        %v1006 = vadd.f32 0.0, %v1005
        %v1007 = vpop.f32.mrb[0].mxu0
        %v1008 = vadd.f32 0.0, %v1007
        %1009 = vmatprep.mubr.f32.mxu0 0.0
        %1010 = vmatmul.mubr.f32.gmra.mrb[0].mxu0 %v820
        %v1011 = vpop.f32.mrb[0].mxu0
        %v1012 = vadd.f32 0.0, %v1011
        %v1013 = vpop.f32.mrb[0].mxu0
        %v1014 = vadd.f32 0.0, %v1013
        %1015 = vmatprep.mubr.f32.mxu0 0.0
        %1016 = vmatmul.mubr.f32.gmra.mrb[0].mxu0 %v823
        %v1017 = vpop.f32.mrb[0].mxu0
        %v1018 = vadd.f32 0.0, %v1017
        %v1019 = vpop.f32.mrb[0].mxu0
        %v1020 = vadd.f32 0.0, %v1019
        %1021 = vmatprep.mubr.f32.mxu0 0.0
        %1022 = vmatmul.mubr.f32.gmra.mrb[0].mxu0 %v826
        %v1023 = vpop.f32.mrb[0].mxu0
        %v1024 = vadd.f32 0.0, %v1023
        %v1025 = vpop.f32.mrb[0].mxu0
        %v1026 = vadd.f32 0.0, %v1025
        %1027 = vmatprep.mubr.f32.mxu0 0.0
        %1028 = vmatmul.mubr.f32.gmra.mrb[0].mxu0 %v829
        %v1029 = vpop.f32.mrb[0].mxu0
        %v1030 = vadd.f32 0.0, %v1029
        %v1031 = vpop.f32.mrb[0].mxu0
        %v1032 = vadd.f32 0.0, %v1031
        %1033 = vmatprep.mubr.f32.mxu0 0.0
        %1034 = vmatmul.mubr.f32.gmra.mrb[0].mxu0 %v832
        %v1035 = vpop.f32.mrb[0].mxu0
        %v1036 = vadd.f32 0.0, %v1035
        %v1037 = vpop.f32.mrb[0].mxu0
        %v1038 = vadd.f32 0.0, %v1037
        %1039 = vmatprep.mubr.f32.mxu0 0.0
        %1040 = vmatmul.mubr.f32.gmra.mrb[0].mxu0 %v835
        %v1041 = vpop.f32.mrb[0].mxu0
        %v1042 = vadd.f32 0.0, %v1041
        %v1043 = vpop.f32.mrb[0].mxu0
        %v1044 = vadd.f32 0.0, %v1043
        %1045 = vmatprep.mubr.f32.mxu0 0.0
        %1046 = vmatmul.mubr.f32.gmra.mrb[0].mxu0 %v838
        %v1047 = vpop.f32.mrb[0].mxu0
        %v1048 = vadd.f32 0.0, %v1047
        %v1049 = vpop.f32.mrb[0].mxu0
        %v1050 = vadd.f32 0.0, %v1049
        %1051 = vmatprep.mubr.f32.mxu0 0.0
        %1052 = vmatmul.mubr.f32.gmra.mrb[0].mxu0 %v841
        %v1053 = vpop.f32.mrb[0].mxu0
        %v1054 = vadd.f32 0.0, %v1053
        %v1055 = vpop.f32.mrb[0].mxu0
        %v1056 = vadd.f32 0.0, %v1055
        %1057 = vmatprep.mubr.f32.mxu0 0.0
        %1058 = vmatmul.mubr.f32.gmra.mrb[0].mxu0 %v844
        %v1059 = vpop.f32.mrb[0].mxu0
        %v1060 = vadd.f32 0.0, %v1059
        %v1061 = vpop.f32.mrb[0].mxu0
        %v1062 = vadd.f32 0.0, %v1061
        %1063 = vmatprep.mubr.f32.mxu0 0.0
        %1064 = vmatmul.mubr.f32.gmra.mrb[0].mxu0 %v847
        %v1065 = vpop.f32.mrb[0].mxu0
        %v1066 = vadd.f32 0.0, %v1065
        %v1067 = vpop.f32.mrb[0].mxu0
        %v1068 = vadd.f32 0.0, %v1067
        %1069 = vmatprep.mubr.f32.mxu0 0.0
        %1070 = vmatmul.mubr.f32.gmra.mrb[0].mxu0 %v850
        %v1071 = vpop.f32.mrb[0].mxu0
        %v1072 = vadd.f32 0.0, %v1071
        %v1073 = vpop.f32.mrb[0].mxu0
        %v1074 = vadd.f32 0.0, %v1073
        %1075 = vmatprep.mubr.f32.mxu0 0.0
        %1076 = vmatmul.mubr.f32.gmra.mrb[0].mxu0 %v853
        %v1077 = vpop.f32.mrb[0].mxu0
        %v1078 = vadd.f32 0.0, %v1077
        %v1079 = vpop.f32.mrb[0].mxu0
        %v1080 = vadd.f32 0.0, %v1079
        %1081 = vmatprep.mubr.f32.mxu0 0.0
        %1082 = vmatmul.mubr.f32.gmra.mrb[0].mxu0 %v856
        %v1083 = vpop.f32.mrb[0].mxu0
        %v1084 = vadd.f32 0.0, %v1083
        %v1085 = vpop.f32.mrb[0].mxu0
        %v1086 = vadd.f32 0.0, %v1085
        %1087 = vmatprep.mubr.f32.mxu0 0.0
        %1088 = vmatmul.mubr.f32.gmra.mrb[0].mxu0 %v859
        %v1089 = vpop.f32.mrb[0].mxu0
        %v1090 = vadd.f32 0.0, %v1089
        %v1091 = vpop.f32.mrb[0].mxu0
        %v1092 = vadd.f32 0.0, %v1091
        %1093 = vdwg.mxu0
        %v1095 = vsel %vm256, %v432, 0
        %v1098 = vsel %vm256, %v433, 0
        %v1101 = vsel %vm256, %v434, 0
        %v1104 = vsel %vm256, %v435, 0
        %v1107 = vsel %vm256, %v436, 0
        %v1110 = vsel %vm256, %v437, 0
        %v1113 = vsel %vm256, %v438, 0
        %v1116 = vsel %vm256, %v439, 0
        %v1119 = vsel %vm256, %v440, 0
        %v1122 = vsel %vm256, %v441, 0
        %v1125 = vsel %vm256, %v442, 0
        %v1128 = vsel %vm256, %v443, 0
        %v1131 = vsel %vm256, %v444, 0
        %v1134 = vsel %vm256, %v445, 0
        %v1137 = vsel %vm256, %v446, 0
        %v1140 = vsel %vm256, %v447, 0
        %v1143 = vsel %vm256, %v448, 0
        %v1146 = vsel %vm256, %v449, 0
        %v1149 = vsel %vm256, %v450, 0
        %v1152 = vsel %vm256, %v451, 0
        %v1155 = vsel %vm256, %v452, 0
        %v1158 = vsel %vm256, %v453, 0
        %v1161 = vsel %vm256, %v454, 0
        %v1164 = vsel %vm256, %v455, 0
        %v1167 = vsel %vm256, %v456, 0
        %v1170 = vsel %vm256, %v457, 0
        %v1173 = vsel %vm256, %v458, 0
        %v1176 = vsel %vm256, %v459, 0
        %1178 = vmatprep.subr.mxu0 %v368
        %1179 = vmatpush1.msra.mxu0 %v366
        %1180 = vmatprep.subr.mxu0 %v374
        %1181 = vmatpush1.msra.mxu0 %v372
        %1182 = vmatprep.subr.mxu0 0.0
        %1183 = vmatpush1.msra.mxu0 0.0
        %1184 = vmatprep.subr.mxu0 0.0
        %1185 = vmatpush1.msra.mxu0 0.0
        %1186 = vmatprep.subr.mxu0 0.0
        %1187 = vmatpush1.msra.mxu0 0.0
        %1188 = vmatprep.subr.mxu0 0.0
        %1189 = vmatpush1.msra.mxu0 0.0
        %1190 = vmatprep.subr.mxu0 0.0
        %1191 = vmatpush1.msra.mxu0 0.0
        %1192 = vmatprep.subr.mxu0 0.0
        %1193 = vmatpush1.msra.mxu0 0.0
        %1194 = vmatprep.subr.mxu0 0.0
        %1195 = vmatpush1.msra.mxu0 0.0
        %1196 = vmatprep.subr.mxu0 0.0
        %1197 = vmatpush1.msra.mxu0 0.0
        %1198 = vmatprep.subr.mxu0 0.0
        %1199 = vmatpush1.msra.mxu0 0.0
        %1200 = vmatprep.subr.mxu0 0.0
        %1201 = vmatpush1.msra.mxu0 0.0
        %1202 = vmatprep.subr.mxu0 0.0
        %1203 = vmatpush1.msra.mxu0 0.0
        %1204 = vmatprep.subr.mxu0 0.0
        %1205 = vmatpush1.msra.mxu0 0.0
        %1206 = vmatprep.subr.mxu0 0.0
        %1207 = vmatpush1.msra.mxu0 0.0
        %1208 = vmatprep.subr.mxu0 0.0
        %1209 = vmatpush1.msra.mxu0 0.0
        %1210 = vmatprep.subr.mxu0 0.0
        %1211 = vmatpush1.msra.mxu0 0.0
        %1212 = vmatprep.subr.mxu0 0.0
        %1213 = vmatpush1.msra.mxu0 0.0
        %1214 = vmatprep.subr.mxu0 0.0
        %1215 = vmatpush1.msra.mxu0 0.0
        %1216 = vmatprep.subr.mxu0 0.0
        %1217 = vmatpush1.msra.mxu0 0.0
        %1218 = vmatprep.subr.mxu0 0.0
        %1219 = vmatpush1.msra.mxu0 0.0
        %1220 = vmatprep.subr.mxu0 0.0
        %1221 = vmatpush1.msra.mxu0 0.0
        %1222 = vmatprep.subr.mxu0 0.0
        %1223 = vmatpush1.msra.mxu0 0.0
        %1224 = vmatprep.subr.mxu0 0.0
        %1225 = vmatpush1.msra.mxu0 0.0
        %1226 = vmatprep.subr.mxu0 0.0
        %1227 = vmatpush1.msra.mxu0 0.0
        %1228 = vmatprep.subr.mxu0 0.0
        %1229 = vmatpush1.msra.mxu0 0.0
        %1230 = vmatprep.subr.mxu0 0.0
        %1231 = vmatpush1.msra.mxu0 0.0
        %1232 = vmatprep.subr.mxu0 0.0
        %1233 = vmatpush1.msra.mxu0 0.0
        %1234 = vmatprep.subr.mxu0 0.0
        %1235 = vmatpush1.msra.mxu0 0.0
        %1236 = vmatprep.subr.mxu0 0.0
        %1237 = vmatpush1.msra.mxu0 0.0
        %1238 = vmatprep.subr.mxu0 0.0
        %1239 = vmatpush1.msra.mxu0 0.0
        %1240 = vmatprep.subr.mxu0 0.0
        %1241 = vmatpush1.msra.mxu0 0.0
        %1242 = vmatprep.mubr.f32.mxu0 0.0
        %1243 = vmatmul.mubr.f32.gmra.mrb[0].mxu0 %v1095
        %v1244 = vpop.f32.mrb[0].mxu0
        %v1245 = vadd.f32 0.0, %v1244
        %v1246 = vpop.f32.mrb[0].mxu0
        %v1247 = vadd.f32 0.0, %v1246
        %1248 = vmatprep.mubr.f32.mxu0 0.0
        %1249 = vmatmul.mubr.f32.gmra.mrb[0].mxu0 %v1098
        %v1250 = vpop.f32.mrb[0].mxu0
        %v1251 = vadd.f32 0.0, %v1250
        %v1252 = vpop.f32.mrb[0].mxu0
        %v1253 = vadd.f32 0.0, %v1252
        %1254 = vmatprep.mubr.f32.mxu0 0.0
        %1255 = vmatmul.mubr.f32.gmra.mrb[0].mxu0 %v1101
        %v1256 = vpop.f32.mrb[0].mxu0
        %v1257 = vadd.f32 0.0, %v1256
        %v1258 = vpop.f32.mrb[0].mxu0
        %v1259 = vadd.f32 0.0, %v1258
        %1260 = vmatprep.mubr.f32.mxu0 0.0
        %1261 = vmatmul.mubr.f32.gmra.mrb[0].mxu0 %v1104
        %v1262 = vpop.f32.mrb[0].mxu0
        %v1263 = vadd.f32 0.0, %v1262
        %v1264 = vpop.f32.mrb[0].mxu0
        %v1265 = vadd.f32 0.0, %v1264
        %1266 = vmatprep.mubr.f32.mxu0 0.0
        %1267 = vmatmul.mubr.f32.gmra.mrb[0].mxu0 %v1107
        %v1268 = vpop.f32.mrb[0].mxu0
        %v1269 = vadd.f32 0.0, %v1268
        %v1270 = vpop.f32.mrb[0].mxu0
        %v1271 = vadd.f32 0.0, %v1270
        %1272 = vmatprep.mubr.f32.mxu0 0.0
        %1273 = vmatmul.mubr.f32.gmra.mrb[0].mxu0 %v1110
        %v1274 = vpop.f32.mrb[0].mxu0
        %v1275 = vadd.f32 0.0, %v1274
        %v1276 = vpop.f32.mrb[0].mxu0
        %v1277 = vadd.f32 0.0, %v1276
        %1278 = vmatprep.mubr.f32.mxu0 0.0
        %1279 = vmatmul.mubr.f32.gmra.mrb[0].mxu0 %v1113
        %v1280 = vpop.f32.mrb[0].mxu0
        %v1281 = vadd.f32 0.0, %v1280
        %v1282 = vpop.f32.mrb[0].mxu0
        %v1283 = vadd.f32 0.0, %v1282
        %1284 = vmatprep.mubr.f32.mxu0 0.0
        %1285 = vmatmul.mubr.f32.gmra.mrb[0].mxu0 %v1116
        %v1286 = vpop.f32.mrb[0].mxu0
        %v1287 = vadd.f32 0.0, %v1286
        %v1288 = vpop.f32.mrb[0].mxu0
        %v1289 = vadd.f32 0.0, %v1288
        %1290 = vmatprep.mubr.f32.mxu0 0.0
        %1291 = vmatmul.mubr.f32.gmra.mrb[0].mxu0 %v1119
        %v1292 = vpop.f32.mrb[0].mxu0
        %v1293 = vadd.f32 0.0, %v1292
        %v1294 = vpop.f32.mrb[0].mxu0
        %v1295 = vadd.f32 0.0, %v1294
        %1296 = vmatprep.mubr.f32.mxu0 0.0
        %1297 = vmatmul.mubr.f32.gmra.mrb[0].mxu0 %v1122
        %v1298 = vpop.f32.mrb[0].mxu0
        %v1299 = vadd.f32 0.0, %v1298
        %v1300 = vpop.f32.mrb[0].mxu0
        %v1301 = vadd.f32 0.0, %v1300
        %1302 = vmatprep.mubr.f32.mxu0 0.0
        %1303 = vmatmul.mubr.f32.gmra.mrb[0].mxu0 %v1125
        %v1304 = vpop.f32.mrb[0].mxu0
        %v1305 = vadd.f32 0.0, %v1304
        %v1306 = vpop.f32.mrb[0].mxu0
        %v1307 = vadd.f32 0.0, %v1306
        %1308 = vmatprep.mubr.f32.mxu0 0.0
        %1309 = vmatmul.mubr.f32.gmra.mrb[0].mxu0 %v1128
        %v1310 = vpop.f32.mrb[0].mxu0
        %v1311 = vadd.f32 0.0, %v1310
        %v1312 = vpop.f32.mrb[0].mxu0
        %v1313 = vadd.f32 0.0, %v1312
        %1314 = vmatprep.mubr.f32.mxu0 0.0
        %1315 = vmatmul.mubr.f32.gmra.mrb[0].mxu0 %v1131
        %v1316 = vpop.f32.mrb[0].mxu0
        %v1317 = vadd.f32 0.0, %v1316
        %v1318 = vpop.f32.mrb[0].mxu0
        %v1319 = vadd.f32 0.0, %v1318
        %1320 = vmatprep.mubr.f32.mxu0 0.0
        %1321 = vmatmul.mubr.f32.gmra.mrb[0].mxu0 %v1134
        %v1322 = vpop.f32.mrb[0].mxu0
        %v1323 = vadd.f32 0.0, %v1322
        %v1324 = vpop.f32.mrb[0].mxu0
        %v1325 = vadd.f32 0.0, %v1324
        %1326 = vmatprep.mubr.f32.mxu0 0.0
        %1327 = vmatmul.mubr.f32.gmra.mrb[0].mxu0 %v1137
        %v1328 = vpop.f32.mrb[0].mxu0
        %v1329 = vadd.f32 0.0, %v1328
        %v1330 = vpop.f32.mrb[0].mxu0
        %v1331 = vadd.f32 0.0, %v1330
        %1332 = vmatprep.mubr.f32.mxu0 0.0
        %1333 = vmatmul.mubr.f32.gmra.mrb[0].mxu0 %v1140
        %v1334 = vpop.f32.mrb[0].mxu0
        %v1335 = vadd.f32 0.0, %v1334
        %v1336 = vpop.f32.mrb[0].mxu0
        %v1337 = vadd.f32 0.0, %v1336
        %1338 = vmatprep.mubr.f32.mxu0 0.0
        %1339 = vmatmul.mubr.f32.gmra.mrb[0].mxu0 %v1143
        %v1340 = vpop.f32.mrb[0].mxu0
        %v1341 = vadd.f32 0.0, %v1340
        %v1342 = vpop.f32.mrb[0].mxu0
        %v1343 = vadd.f32 0.0, %v1342
        %1344 = vmatprep.mubr.f32.mxu0 0.0
        %1345 = vmatmul.mubr.f32.gmra.mrb[0].mxu0 %v1146
        %v1346 = vpop.f32.mrb[0].mxu0
        %v1347 = vadd.f32 0.0, %v1346
        %v1348 = vpop.f32.mrb[0].mxu0
        %v1349 = vadd.f32 0.0, %v1348
        %1350 = vmatprep.mubr.f32.mxu0 0.0
        %1351 = vmatmul.mubr.f32.gmra.mrb[0].mxu0 %v1149
        %v1352 = vpop.f32.mrb[0].mxu0
        %v1353 = vadd.f32 0.0, %v1352
        %v1354 = vpop.f32.mrb[0].mxu0
        %v1355 = vadd.f32 0.0, %v1354
        %1356 = vmatprep.mubr.f32.mxu0 0.0
        %1357 = vmatmul.mubr.f32.gmra.mrb[0].mxu0 %v1152
        %v1358 = vpop.f32.mrb[0].mxu0
        %v1359 = vadd.f32 0.0, %v1358
        %v1360 = vpop.f32.mrb[0].mxu0
        %v1361 = vadd.f32 0.0, %v1360
        %1362 = vmatprep.mubr.f32.mxu0 0.0
        %1363 = vmatmul.mubr.f32.gmra.mrb[0].mxu0 %v1155
        %v1364 = vpop.f32.mrb[0].mxu0
        %v1365 = vadd.f32 0.0, %v1364
        %v1366 = vpop.f32.mrb[0].mxu0
        %v1367 = vadd.f32 0.0, %v1366
        %1368 = vmatprep.mubr.f32.mxu0 0.0
        %1369 = vmatmul.mubr.f32.gmra.mrb[0].mxu0 %v1158
        %v1370 = vpop.f32.mrb[0].mxu0
        %v1371 = vadd.f32 0.0, %v1370
        %v1372 = vpop.f32.mrb[0].mxu0
        %v1373 = vadd.f32 0.0, %v1372
        %1374 = vmatprep.mubr.f32.mxu0 0.0
        %1375 = vmatmul.mubr.f32.gmra.mrb[0].mxu0 %v1161
        %v1376 = vpop.f32.mrb[0].mxu0
        %v1377 = vadd.f32 0.0, %v1376
        %v1378 = vpop.f32.mrb[0].mxu0
        %v1379 = vadd.f32 0.0, %v1378
        %1380 = vmatprep.mubr.f32.mxu0 0.0
        %1381 = vmatmul.mubr.f32.gmra.mrb[0].mxu0 %v1164
        %v1382 = vpop.f32.mrb[0].mxu0
        %v1383 = vadd.f32 0.0, %v1382
        %v1384 = vpop.f32.mrb[0].mxu0
        %v1385 = vadd.f32 0.0, %v1384
        %1386 = vmatprep.mubr.f32.mxu0 0.0
        %1387 = vmatmul.mubr.f32.gmra.mrb[0].mxu0 %v1167
        %v1388 = vpop.f32.mrb[0].mxu0
        %v1389 = vadd.f32 0.0, %v1388
        %v1390 = vpop.f32.mrb[0].mxu0
        %v1391 = vadd.f32 0.0, %v1390
        %1392 = vmatprep.mubr.f32.mxu0 0.0
        %1393 = vmatmul.mubr.f32.gmra.mrb[0].mxu0 %v1170
        %v1394 = vpop.f32.mrb[0].mxu0
        %v1395 = vadd.f32 0.0, %v1394
        %v1396 = vpop.f32.mrb[0].mxu0
        %v1397 = vadd.f32 0.0, %v1396
        %1398 = vmatprep.mubr.f32.mxu0 0.0
        %1399 = vmatmul.mubr.f32.gmra.mrb[0].mxu0 %v1173
        %v1400 = vpop.f32.mrb[0].mxu0
        %v1401 = vadd.f32 0.0, %v1400
        %v1402 = vpop.f32.mrb[0].mxu0
        %v1403 = vadd.f32 0.0, %v1402
        %1404 = vmatprep.mubr.f32.mxu0 0.0
        %1405 = vmatmul.mubr.f32.gmra.mrb[0].mxu0 %v1176
        %v1406 = vpop.f32.mrb[0].mxu0
        %v1407 = vadd.f32 0.0, %v1406
        %v1408 = vpop.f32.mrb[0].mxu0
        %v1409 = vadd.f32 0.0, %v1408
        %1410 = vdwg.mxu0
        %v1411 = vld [vmem:[%s3] sm:$0x1]
        %v1412 = vld [vmem:[%s3 + $0x1] sm:$0x1]
        %v1413 = vld [vmem:[%s3 + $0x2] sm:$0x1]
        %v1417 = vlaneseq
        %v1418 = vshrl.u32 %v1417, 7
        %v1419 = vsub.s32 0, %v1418
        %v1420 = vrot.slane %v1411, %v1419
        %v1421 = vlaneseq
        %v1422 = vshrl.u32 %v1421, 7
        %v1423 = vsub.s32 0, %v1422
        %v1424 = vrot.slane %v1412, %v1423
        %v1425 = vlaneseq
        %v1426 = vshrl.u32 %v1425, 7
        %v1427 = vsub.s32 0, %v1426
        %v1428 = vrot.slane %v1413, %v1427
        %1429 = vset.pattern.permute.xlu0 0
        %1430 = vperm.xlu0 %1429, %v1420
        %v1431 = vpop.permute.xlu0 %1430
        %1433 = vset.pattern.permute.xlu0 0
        %1434 = vperm.xlu0 %1433, %v1424
        %v1435 = vpop.permute.xlu0 %1434
        %1437 = vset.pattern.permute.xlu0 0
        %1438 = vperm.xlu0 %1437, %v1428
        %v1439 = vpop.permute.xlu0 %1438
        %v1441 = vadd.f32 %v611, %v1431
        %v1442 = vadd.f32 %v613, %v1431
        %v1443 = vadd.f32 %v617, %v1431
        %v1444 = vadd.f32 %v619, %v1431
        %v1445 = vadd.f32 %v623, %v1431
        %v1446 = vadd.f32 %v625, %v1431
        %v1447 = vadd.f32 %v629, %v1431
        %v1448 = vadd.f32 %v631, %v1431
        %v1449 = vadd.f32 %v635, %v1431
        %v1450 = vadd.f32 %v637, %v1431
        %v1451 = vadd.f32 %v641, %v1431
        %v1452 = vadd.f32 %v643, %v1431
        %v1453 = vadd.f32 %v647, %v1431
        %v1454 = vadd.f32 %v649, %v1431
        %v1455 = vadd.f32 %v653, %v1431
        %v1456 = vadd.f32 %v655, %v1431
        %v1457 = vadd.f32 %v659, %v1431
        %v1458 = vadd.f32 %v661, %v1431
        %v1459 = vadd.f32 %v665, %v1431
        %v1460 = vadd.f32 %v667, %v1431
        %v1461 = vadd.f32 %v671, %v1431
        %v1462 = vadd.f32 %v673, %v1431
        %v1463 = vadd.f32 %v677, %v1431
        %v1464 = vadd.f32 %v679, %v1431
        %v1465 = vadd.f32 %v683, %v1431
        %v1466 = vadd.f32 %v685, %v1431
        %v1467 = vadd.f32 %v689, %v1431
        %v1468 = vadd.f32 %v691, %v1431
        %v1469 = vadd.f32 %v695, %v1431
        %v1470 = vadd.f32 %v697, %v1431
        %v1471 = vadd.f32 %v701, %v1431
        %v1472 = vadd.f32 %v703, %v1431
        %v1473 = vadd.f32 %v707, %v1431
        %v1474 = vadd.f32 %v709, %v1431
        %v1475 = vadd.f32 %v713, %v1431
        %v1476 = vadd.f32 %v715, %v1431
        %v1477 = vadd.f32 %v719, %v1431
        %v1478 = vadd.f32 %v721, %v1431
        %v1479 = vadd.f32 %v725, %v1431
        %v1480 = vadd.f32 %v727, %v1431
        %v1481 = vadd.f32 %v731, %v1431
        %v1482 = vadd.f32 %v733, %v1431
        %v1483 = vadd.f32 %v737, %v1431
        %v1484 = vadd.f32 %v739, %v1431
        %v1485 = vadd.f32 %v743, %v1431
        %v1486 = vadd.f32 %v745, %v1431
        %v1487 = vadd.f32 %v749, %v1431
        %v1488 = vadd.f32 %v751, %v1431
        %v1489 = vadd.f32 %v755, %v1431
        %v1490 = vadd.f32 %v757, %v1431
        %v1491 = vadd.f32 %v761, %v1431
        %v1492 = vadd.f32 %v763, %v1431
        %v1493 = vadd.f32 %v767, %v1431
        %v1494 = vadd.f32 %v769, %v1431
        %v1495 = vadd.f32 %v773, %v1431
        %v1496 = vadd.f32 %v775, %v1431
        %v1497 = vadd.f32 %v928, %v1435
        %v1498 = vadd.f32 %v930, %v1435
        %v1499 = vadd.f32 %v934, %v1435
        %v1500 = vadd.f32 %v936, %v1435
        %v1501 = vadd.f32 %v940, %v1435
        %v1502 = vadd.f32 %v942, %v1435
        %v1503 = vadd.f32 %v946, %v1435
        %v1504 = vadd.f32 %v948, %v1435
        %v1505 = vadd.f32 %v952, %v1435
        %v1506 = vadd.f32 %v954, %v1435
        %v1507 = vadd.f32 %v958, %v1435
        %v1508 = vadd.f32 %v960, %v1435
        %v1509 = vadd.f32 %v964, %v1435
        %v1510 = vadd.f32 %v966, %v1435
        %v1511 = vadd.f32 %v970, %v1435
        %v1512 = vadd.f32 %v972, %v1435
        %v1513 = vadd.f32 %v976, %v1435
        %v1514 = vadd.f32 %v978, %v1435
        %v1515 = vadd.f32 %v982, %v1435
        %v1516 = vadd.f32 %v984, %v1435
        %v1517 = vadd.f32 %v988, %v1435
        %v1518 = vadd.f32 %v990, %v1435
        %v1519 = vadd.f32 %v994, %v1435
        %v1520 = vadd.f32 %v996, %v1435
        %v1521 = vadd.f32 %v1000, %v1435
        %v1522 = vadd.f32 %v1002, %v1435
        %v1523 = vadd.f32 %v1006, %v1435
        %v1524 = vadd.f32 %v1008, %v1435
        %v1525 = vadd.f32 %v1012, %v1435
        %v1526 = vadd.f32 %v1014, %v1435
        %v1527 = vadd.f32 %v1018, %v1435
        %v1528 = vadd.f32 %v1020, %v1435
        %v1529 = vadd.f32 %v1024, %v1435
        %v1530 = vadd.f32 %v1026, %v1435
        %v1531 = vadd.f32 %v1030, %v1435
        %v1532 = vadd.f32 %v1032, %v1435
        %v1533 = vadd.f32 %v1036, %v1435
        %v1534 = vadd.f32 %v1038, %v1435
        %v1535 = vadd.f32 %v1042, %v1435
        %v1536 = vadd.f32 %v1044, %v1435
        %v1537 = vadd.f32 %v1048, %v1435
        %v1538 = vadd.f32 %v1050, %v1435
        %v1539 = vadd.f32 %v1054, %v1435
        %v1540 = vadd.f32 %v1056, %v1435
        %v1541 = vadd.f32 %v1060, %v1435
        %v1542 = vadd.f32 %v1062, %v1435
        %v1543 = vadd.f32 %v1066, %v1435
        %v1544 = vadd.f32 %v1068, %v1435
        %v1545 = vadd.f32 %v1072, %v1435
        %v1546 = vadd.f32 %v1074, %v1435
        %v1547 = vadd.f32 %v1078, %v1435
        %v1548 = vadd.f32 %v1080, %v1435
        %v1549 = vadd.f32 %v1084, %v1435
        %v1550 = vadd.f32 %v1086, %v1435
        %v1551 = vadd.f32 %v1090, %v1435
        %v1552 = vadd.f32 %v1092, %v1435
        %v1553 = vadd.f32 %v1245, %v1439
        %v1554 = vadd.f32 %v1247, %v1439
        %v1555 = vadd.f32 %v1251, %v1439
        %v1556 = vadd.f32 %v1253, %v1439
        %v1557 = vadd.f32 %v1257, %v1439
        %v1558 = vadd.f32 %v1259, %v1439
        %v1559 = vadd.f32 %v1263, %v1439
        %v1560 = vadd.f32 %v1265, %v1439
        %v1561 = vadd.f32 %v1269, %v1439
        %v1562 = vadd.f32 %v1271, %v1439
        %v1563 = vadd.f32 %v1275, %v1439
        %v1564 = vadd.f32 %v1277, %v1439
        %v1565 = vadd.f32 %v1281, %v1439
        %v1566 = vadd.f32 %v1283, %v1439
        %v1567 = vadd.f32 %v1287, %v1439
        %v1568 = vadd.f32 %v1289, %v1439
        %v1569 = vadd.f32 %v1293, %v1439
        %v1570 = vadd.f32 %v1295, %v1439
        %v1571 = vadd.f32 %v1299, %v1439
        %v1572 = vadd.f32 %v1301, %v1439
        %v1573 = vadd.f32 %v1305, %v1439
        %v1574 = vadd.f32 %v1307, %v1439
        %v1575 = vadd.f32 %v1311, %v1439
        %v1576 = vadd.f32 %v1313, %v1439
        %v1577 = vadd.f32 %v1317, %v1439
        %v1578 = vadd.f32 %v1319, %v1439
        %v1579 = vadd.f32 %v1323, %v1439
        %v1580 = vadd.f32 %v1325, %v1439
        %v1581 = vadd.f32 %v1329, %v1439
        %v1582 = vadd.f32 %v1331, %v1439
        %v1583 = vadd.f32 %v1335, %v1439
        %v1584 = vadd.f32 %v1337, %v1439
        %v1585 = vadd.f32 %v1341, %v1439
        %v1586 = vadd.f32 %v1343, %v1439
        %v1587 = vadd.f32 %v1347, %v1439
        %v1588 = vadd.f32 %v1349, %v1439
        %v1589 = vadd.f32 %v1353, %v1439
        %v1590 = vadd.f32 %v1355, %v1439
        %v1591 = vadd.f32 %v1359, %v1439
        %v1592 = vadd.f32 %v1361, %v1439
        %v1593 = vadd.f32 %v1365, %v1439
        %v1594 = vadd.f32 %v1367, %v1439
        %v1595 = vadd.f32 %v1371, %v1439
        %v1596 = vadd.f32 %v1373, %v1439
        %v1597 = vadd.f32 %v1377, %v1439
        %v1598 = vadd.f32 %v1379, %v1439
        %v1599 = vadd.f32 %v1383, %v1439
        %v1600 = vadd.f32 %v1385, %v1439
        %v1601 = vadd.f32 %v1389, %v1439
        %v1602 = vadd.f32 %v1391, %v1439
        %v1603 = vadd.f32 %v1395, %v1439
        %v1604 = vadd.f32 %v1397, %v1439
        %v1605 = vadd.f32 %v1401, %v1439
        %v1606 = vadd.f32 %v1403, %v1439
        %v1607 = vadd.f32 %v1407, %v1439
        %v1608 = vadd.f32 %v1409, %v1439
        %v1609 = vpack.c.bf16 %v1443, %v1441
        %v1610 = vpack.c.bf16 %v1444, %v1442
        %v1611 = vpack.c.bf16 %v1447, %v1445
        %v1612 = vpack.c.bf16 %v1448, %v1446
        %v1613 = vpack.c.bf16 %v1451, %v1449
        %v1614 = vpack.c.bf16 %v1452, %v1450
        %v1615 = vpack.c.bf16 %v1455, %v1453
        %v1616 = vpack.c.bf16 %v1456, %v1454
        %v1617 = vpack.c.bf16 %v1459, %v1457
        %v1618 = vpack.c.bf16 %v1460, %v1458
        %v1619 = vpack.c.bf16 %v1463, %v1461
        %v1620 = vpack.c.bf16 %v1464, %v1462
        %v1621 = vpack.c.bf16 %v1467, %v1465
        %v1622 = vpack.c.bf16 %v1468, %v1466
        %v1623 = vpack.c.bf16 %v1471, %v1469
        %v1624 = vpack.c.bf16 %v1472, %v1470
        %v1625 = vpack.c.bf16 %v1475, %v1473
        %v1626 = vpack.c.bf16 %v1476, %v1474
        %v1627 = vpack.c.bf16 %v1479, %v1477
        %v1628 = vpack.c.bf16 %v1480, %v1478
        %v1629 = vpack.c.bf16 %v1483, %v1481
        %v1630 = vpack.c.bf16 %v1484, %v1482
        %v1631 = vpack.c.bf16 %v1487, %v1485
        %v1632 = vpack.c.bf16 %v1488, %v1486
        %v1633 = vpack.c.bf16 %v1491, %v1489
        %v1634 = vpack.c.bf16 %v1492, %v1490
        %v1635 = vpack.c.bf16 %v1495, %v1493
        %v1636 = vpack.c.bf16 %v1496, %v1494
        %v1637 = vpack.c.bf16 %v1499, %v1497
        %v1638 = vpack.c.bf16 %v1500, %v1498
        %v1639 = vpack.c.bf16 %v1503, %v1501
        %v1640 = vpack.c.bf16 %v1504, %v1502
        %v1641 = vpack.c.bf16 %v1507, %v1505
        %v1642 = vpack.c.bf16 %v1508, %v1506
        %v1643 = vpack.c.bf16 %v1511, %v1509
        %v1644 = vpack.c.bf16 %v1512, %v1510
        %v1645 = vpack.c.bf16 %v1515, %v1513
        %v1646 = vpack.c.bf16 %v1516, %v1514
        %v1647 = vpack.c.bf16 %v1519, %v1517
        %v1648 = vpack.c.bf16 %v1520, %v1518
        %v1649 = vpack.c.bf16 %v1523, %v1521
        %v1650 = vpack.c.bf16 %v1524, %v1522
        %v1651 = vpack.c.bf16 %v1527, %v1525
        %v1652 = vpack.c.bf16 %v1528, %v1526
        %v1653 = vpack.c.bf16 %v1531, %v1529
        %v1654 = vpack.c.bf16 %v1532, %v1530
        %v1655 = vpack.c.bf16 %v1535, %v1533
        %v1656 = vpack.c.bf16 %v1536, %v1534
        %v1657 = vpack.c.bf16 %v1539, %v1537
        %v1658 = vpack.c.bf16 %v1540, %v1538
        %v1659 = vpack.c.bf16 %v1543, %v1541
        %v1660 = vpack.c.bf16 %v1544, %v1542
        %v1661 = vpack.c.bf16 %v1547, %v1545
        %v1662 = vpack.c.bf16 %v1548, %v1546
        %v1663 = vpack.c.bf16 %v1551, %v1549
        %v1664 = vpack.c.bf16 %v1552, %v1550
        %v1665 = vpack.c.bf16 %v1555, %v1553
        %v1666 = vpack.c.bf16 %v1556, %v1554
        %v1667 = vpack.c.bf16 %v1559, %v1557
        %v1668 = vpack.c.bf16 %v1560, %v1558
        %v1669 = vpack.c.bf16 %v1563, %v1561
        %v1670 = vpack.c.bf16 %v1564, %v1562
        %v1671 = vpack.c.bf16 %v1567, %v1565
        %v1672 = vpack.c.bf16 %v1568, %v1566
        %v1673 = vpack.c.bf16 %v1571, %v1569
        %v1674 = vpack.c.bf16 %v1572, %v1570
        %v1675 = vpack.c.bf16 %v1575, %v1573
        %v1676 = vpack.c.bf16 %v1576, %v1574
        %v1677 = vpack.c.bf16 %v1579, %v1577
        %v1678 = vpack.c.bf16 %v1580, %v1578
        %v1679 = vpack.c.bf16 %v1583, %v1581
        %v1680 = vpack.c.bf16 %v1584, %v1582
        %v1681 = vpack.c.bf16 %v1587, %v1585
        %v1682 = vpack.c.bf16 %v1588, %v1586
        %v1683 = vpack.c.bf16 %v1591, %v1589
        %v1684 = vpack.c.bf16 %v1592, %v1590
        %v1685 = vpack.c.bf16 %v1595, %v1593
        %v1686 = vpack.c.bf16 %v1596, %v1594
        %v1687 = vpack.c.bf16 %v1599, %v1597
        %v1688 = vpack.c.bf16 %v1600, %v1598
        %v1689 = vpack.c.bf16 %v1603, %v1601
        %v1690 = vpack.c.bf16 %v1604, %v1602
        %v1691 = vpack.c.bf16 %v1607, %v1605
        %v1692 = vpack.c.bf16 %v1608, %v1606
        %v1777 = vunpack.c.l.b16 %v1609
        %v1778 = vunpack.c.l.b16 %v1610
        %v1779 = vunpack.c.h.b16 %v1609
        %v1780 = vunpack.c.h.b16 %v1610
        %v1781 = vunpack.c.l.b16 %v1611
        %v1782 = vunpack.c.l.b16 %v1612
        %v1783 = vunpack.c.h.b16 %v1611
        %v1784 = vunpack.c.h.b16 %v1612
        %v1785 = vunpack.c.l.b16 %v1613
        %v1786 = vunpack.c.l.b16 %v1614
        %v1787 = vunpack.c.h.b16 %v1613
        %v1788 = vunpack.c.h.b16 %v1614
        %v1789 = vunpack.c.l.b16 %v1615
        %v1790 = vunpack.c.l.b16 %v1616
        %v1791 = vunpack.c.h.b16 %v1615
        %v1792 = vunpack.c.h.b16 %v1616
        %v1793 = vunpack.c.l.b16 %v1617
        %v1794 = vunpack.c.l.b16 %v1618
        %v1795 = vunpack.c.h.b16 %v1617
        %v1796 = vunpack.c.h.b16 %v1618
        %v1797 = vunpack.c.l.b16 %v1619
        %v1798 = vunpack.c.l.b16 %v1620
        %v1799 = vunpack.c.h.b16 %v1619
        %v1800 = vunpack.c.h.b16 %v1620
        %v1801 = vunpack.c.l.b16 %v1621
        %v1802 = vunpack.c.l.b16 %v1622
        %v1803 = vunpack.c.h.b16 %v1621
        %v1804 = vunpack.c.h.b16 %v1622
        %v1805 = vunpack.c.l.b16 %v1623
        %v1806 = vunpack.c.l.b16 %v1624
        %v1807 = vunpack.c.h.b16 %v1623
        %v1808 = vunpack.c.h.b16 %v1624
        %v1809 = vunpack.c.l.b16 %v1625
        %v1810 = vunpack.c.l.b16 %v1626
        %v1811 = vunpack.c.h.b16 %v1625
        %v1812 = vunpack.c.h.b16 %v1626
        %v1813 = vunpack.c.l.b16 %v1627
        %v1814 = vunpack.c.l.b16 %v1628
        %v1815 = vunpack.c.h.b16 %v1627
        %v1816 = vunpack.c.h.b16 %v1628
        %v1817 = vunpack.c.l.b16 %v1629
        %v1818 = vunpack.c.l.b16 %v1630
        %v1819 = vunpack.c.h.b16 %v1629
        %v1820 = vunpack.c.h.b16 %v1630
        %v1821 = vunpack.c.l.b16 %v1631
        %v1822 = vunpack.c.l.b16 %v1632
        %v1823 = vunpack.c.h.b16 %v1631
        %v1824 = vunpack.c.h.b16 %v1632
        %v1825 = vunpack.c.l.b16 %v1633
        %v1826 = vunpack.c.l.b16 %v1634
        %v1827 = vunpack.c.h.b16 %v1633
        %v1828 = vunpack.c.h.b16 %v1634
        %v1829 = vunpack.c.l.b16 %v1635
        %v1830 = vunpack.c.l.b16 %v1636
        %v1831 = vunpack.c.h.b16 %v1635
        %v1832 = vunpack.c.h.b16 %v1636
        %v1833 = vunpack.c.l.b16 %v1637
        %v1834 = vunpack.c.l.b16 %v1638
        %v1835 = vunpack.c.h.b16 %v1637
        %v1836 = vunpack.c.h.b16 %v1638
        %v1837 = vunpack.c.l.b16 %v1639
        %v1838 = vunpack.c.l.b16 %v1640
        %v1839 = vunpack.c.h.b16 %v1639
        %v1840 = vunpack.c.h.b16 %v1640
        %v1841 = vunpack.c.l.b16 %v1641
        %v1842 = vunpack.c.l.b16 %v1642
        %v1843 = vunpack.c.h.b16 %v1641
        %v1844 = vunpack.c.h.b16 %v1642
        %v1845 = vunpack.c.l.b16 %v1643
        %v1846 = vunpack.c.l.b16 %v1644
        %v1847 = vunpack.c.h.b16 %v1643
        %v1848 = vunpack.c.h.b16 %v1644
        %v1849 = vunpack.c.l.b16 %v1645
        %v1850 = vunpack.c.l.b16 %v1646
        %v1851 = vunpack.c.h.b16 %v1645
        %v1852 = vunpack.c.h.b16 %v1646
        %v1853 = vunpack.c.l.b16 %v1647
        %v1854 = vunpack.c.l.b16 %v1648
        %v1855 = vunpack.c.h.b16 %v1647
        %v1856 = vunpack.c.h.b16 %v1648
        %v1857 = vunpack.c.l.b16 %v1649
        %v1858 = vunpack.c.l.b16 %v1650
        %v1859 = vunpack.c.h.b16 %v1649
        %v1860 = vunpack.c.h.b16 %v1650
        %v1861 = vunpack.c.l.b16 %v1651
        %v1862 = vunpack.c.l.b16 %v1652
        %v1863 = vunpack.c.h.b16 %v1651
        %v1864 = vunpack.c.h.b16 %v1652
        %v1865 = vunpack.c.l.b16 %v1653
        %v1866 = vunpack.c.l.b16 %v1654
        %v1867 = vunpack.c.h.b16 %v1653
        %v1868 = vunpack.c.h.b16 %v1654
        %v1869 = vunpack.c.l.b16 %v1655
        %v1870 = vunpack.c.l.b16 %v1656
        %v1871 = vunpack.c.h.b16 %v1655
        %v1872 = vunpack.c.h.b16 %v1656
        %v1873 = vunpack.c.l.b16 %v1657
        %v1874 = vunpack.c.l.b16 %v1658
        %v1875 = vunpack.c.h.b16 %v1657
        %v1876 = vunpack.c.h.b16 %v1658
        %v1877 = vunpack.c.l.b16 %v1659
        %v1878 = vunpack.c.l.b16 %v1660
        %v1879 = vunpack.c.h.b16 %v1659
        %v1880 = vunpack.c.h.b16 %v1660
        %v1881 = vunpack.c.l.b16 %v1661
        %v1882 = vunpack.c.l.b16 %v1662
        %v1883 = vunpack.c.h.b16 %v1661
        %v1884 = vunpack.c.h.b16 %v1662
        %v1885 = vunpack.c.l.b16 %v1663
        %v1886 = vunpack.c.l.b16 %v1664
        %v1887 = vunpack.c.h.b16 %v1663
        %v1888 = vunpack.c.h.b16 %v1664
        %v1889 = vunpack.c.l.b16 %v1665
        %v1890 = vunpack.c.l.b16 %v1666
        %v1891 = vunpack.c.h.b16 %v1665
        %v1892 = vunpack.c.h.b16 %v1666
        %v1893 = vunpack.c.l.b16 %v1667
        %v1894 = vunpack.c.l.b16 %v1668
        %v1895 = vunpack.c.h.b16 %v1667
        %v1896 = vunpack.c.h.b16 %v1668
        %v1897 = vunpack.c.l.b16 %v1669
        %v1898 = vunpack.c.l.b16 %v1670
        %v1899 = vunpack.c.h.b16 %v1669
        %v1900 = vunpack.c.h.b16 %v1670
        %v1901 = vunpack.c.l.b16 %v1671
        %v1902 = vunpack.c.l.b16 %v1672
        %v1903 = vunpack.c.h.b16 %v1671
        %v1904 = vunpack.c.h.b16 %v1672
        %v1905 = vunpack.c.l.b16 %v1673
        %v1906 = vunpack.c.l.b16 %v1674
        %v1907 = vunpack.c.h.b16 %v1673
        %v1908 = vunpack.c.h.b16 %v1674
        %v1909 = vunpack.c.l.b16 %v1675
        %v1910 = vunpack.c.l.b16 %v1676
        %v1911 = vunpack.c.h.b16 %v1675
        %v1912 = vunpack.c.h.b16 %v1676
        %v1913 = vunpack.c.l.b16 %v1677
        %v1914 = vunpack.c.l.b16 %v1678
        %v1915 = vunpack.c.h.b16 %v1677
        %v1916 = vunpack.c.h.b16 %v1678
        %v1917 = vunpack.c.l.b16 %v1679
        %v1918 = vunpack.c.l.b16 %v1680
        %v1919 = vunpack.c.h.b16 %v1679
        %v1920 = vunpack.c.h.b16 %v1680
        %v1921 = vunpack.c.l.b16 %v1681
        %v1922 = vunpack.c.l.b16 %v1682
        %v1923 = vunpack.c.h.b16 %v1681
        %v1924 = vunpack.c.h.b16 %v1682
        %v1925 = vunpack.c.l.b16 %v1683
        %v1926 = vunpack.c.l.b16 %v1684
        %v1927 = vunpack.c.h.b16 %v1683
        %v1928 = vunpack.c.h.b16 %v1684
        %v1929 = vunpack.c.l.b16 %v1685
        %v1930 = vunpack.c.l.b16 %v1686
        %v1931 = vunpack.c.h.b16 %v1685
        %v1932 = vunpack.c.h.b16 %v1686
        %v1933 = vunpack.c.l.b16 %v1687
        %v1934 = vunpack.c.l.b16 %v1688
        %v1935 = vunpack.c.h.b16 %v1687
        %v1936 = vunpack.c.h.b16 %v1688
        %v1937 = vunpack.c.l.b16 %v1689
        %v1938 = vunpack.c.l.b16 %v1690
        %v1939 = vunpack.c.h.b16 %v1689
        %v1940 = vunpack.c.h.b16 %v1690
        %v1941 = vunpack.c.l.b16 %v1691
        %v1942 = vunpack.c.l.b16 %v1692
        %v1943 = vunpack.c.h.b16 %v1691
        %v1944 = vunpack.c.h.b16 %v1692
        %v1945 = vpack.c.b16 %v1778, %v1777
        %v1946 = vpack.c.b16 %v1780, %v1779
        %v1947 = vpack.c.b16 %v1782, %v1781
        %v1948 = vpack.c.b16 %v1784, %v1783
        %v1949 = vpack.c.b16 %v1786, %v1785
        %v1950 = vpack.c.b16 %v1788, %v1787
        %v1951 = vpack.c.b16 %v1790, %v1789
        %v1952 = vpack.c.b16 %v1792, %v1791
        %v1953 = vpack.c.b16 %v1794, %v1793
        %v1954 = vpack.c.b16 %v1796, %v1795
        %v1955 = vpack.c.b16 %v1798, %v1797
        %v1956 = vpack.c.b16 %v1800, %v1799
        %v1957 = vpack.c.b16 %v1802, %v1801
        %v1958 = vpack.c.b16 %v1804, %v1803
        %v1959 = vpack.c.b16 %v1806, %v1805
        %v1960 = vpack.c.b16 %v1808, %v1807
        %v1961 = vpack.c.b16 %v1810, %v1809
        %v1962 = vpack.c.b16 %v1812, %v1811
        %v1963 = vpack.c.b16 %v1814, %v1813
        %v1964 = vpack.c.b16 %v1816, %v1815
        %v1965 = vpack.c.b16 %v1818, %v1817
        %v1966 = vpack.c.b16 %v1820, %v1819
        %v1967 = vpack.c.b16 %v1822, %v1821
        %v1968 = vpack.c.b16 %v1824, %v1823
        %v1969 = vpack.c.b16 %v1826, %v1825
        %v1970 = vpack.c.b16 %v1828, %v1827
        %v1971 = vpack.c.b16 %v1830, %v1829
        %v1972 = vpack.c.b16 %v1832, %v1831
        %v1973 = vpack.c.b16 %v1834, %v1833
        %v1974 = vpack.c.b16 %v1836, %v1835
        %v1975 = vpack.c.b16 %v1838, %v1837
        %v1976 = vpack.c.b16 %v1840, %v1839
        %v1977 = vpack.c.b16 %v1842, %v1841
        %v1978 = vpack.c.b16 %v1844, %v1843
        %v1979 = vpack.c.b16 %v1846, %v1845
        %v1980 = vpack.c.b16 %v1848, %v1847
        %v1981 = vpack.c.b16 %v1850, %v1849
        %v1982 = vpack.c.b16 %v1852, %v1851
        %v1983 = vpack.c.b16 %v1854, %v1853
        %v1984 = vpack.c.b16 %v1856, %v1855
        %v1985 = vpack.c.b16 %v1858, %v1857
        %v1986 = vpack.c.b16 %v1860, %v1859
        %v1987 = vpack.c.b16 %v1862, %v1861
        %v1988 = vpack.c.b16 %v1864, %v1863
        %v1989 = vpack.c.b16 %v1866, %v1865
        %v1990 = vpack.c.b16 %v1868, %v1867
        %v1991 = vpack.c.b16 %v1870, %v1869
        %v1992 = vpack.c.b16 %v1872, %v1871
        %v1993 = vpack.c.b16 %v1874, %v1873
        %v1994 = vpack.c.b16 %v1876, %v1875
        %v1995 = vpack.c.b16 %v1878, %v1877
        %v1996 = vpack.c.b16 %v1880, %v1879
        %v1997 = vpack.c.b16 %v1882, %v1881
        %v1998 = vpack.c.b16 %v1884, %v1883
        %v1999 = vpack.c.b16 %v1886, %v1885
        %v2000 = vpack.c.b16 %v1888, %v1887
        %v2001 = vpack.c.b16 %v1890, %v1889
        %v2002 = vpack.c.b16 %v1892, %v1891
        %v2003 = vpack.c.b16 %v1894, %v1893
        %v2004 = vpack.c.b16 %v1896, %v1895
        %v2005 = vpack.c.b16 %v1898, %v1897
        %v2006 = vpack.c.b16 %v1900, %v1899
        %v2007 = vpack.c.b16 %v1902, %v1901
        %v2008 = vpack.c.b16 %v1904, %v1903
        %v2009 = vpack.c.b16 %v1906, %v1905
        %v2010 = vpack.c.b16 %v1908, %v1907
        %v2011 = vpack.c.b16 %v1910, %v1909
        %v2012 = vpack.c.b16 %v1912, %v1911
        %v2013 = vpack.c.b16 %v1914, %v1913
        %v2014 = vpack.c.b16 %v1916, %v1915
        %v2015 = vpack.c.b16 %v1918, %v1917
        %v2016 = vpack.c.b16 %v1920, %v1919
        %v2017 = vpack.c.b16 %v1922, %v1921
        %v2018 = vpack.c.b16 %v1924, %v1923
        %v2019 = vpack.c.b16 %v1926, %v1925
        %v2020 = vpack.c.b16 %v1928, %v1927
        %v2021 = vpack.c.b16 %v1930, %v1929
        %v2022 = vpack.c.b16 %v1932, %v1931
        %v2023 = vpack.c.b16 %v1934, %v1933
        %v2024 = vpack.c.b16 %v1936, %v1935
        %v2025 = vpack.c.b16 %v1938, %v1937
        %v2026 = vpack.c.b16 %v1940, %v1939
        %v2027 = vpack.c.b16 %v1942, %v1941
        %v2028 = vpack.c.b16 %v1944, %v1943
        %vm2113 = vcmask 1043456
        %vm2114 = vcmask 785412
        %vm2115 = vmor %vm2114, %vm2113
        %2116 = vst.msk [vmem:[%s218] sm:$0xff] %vm2115, %v1945
        %2117 = vst.msk [vmem:[%s218 + $0x8] sm:$0xff] %vm2115, %v1946
        %2118 = vst.msk [vmem:[%s218 + $0x10] sm:$0xff] %vm2115, %v1947
        %2119 = vst.msk [vmem:[%s218 + $0x18] sm:$0xff] %vm2115, %v1948
        %2120 = vst.msk [vmem:[%s218 + $0x20] sm:$0xff] %vm2115, %v1949
        %2121 = vst.msk [vmem:[%s218 + $0x28] sm:$0xff] %vm2115, %v1950
        %2122 = vst.msk [vmem:[%s218 + $0x30] sm:$0xff] %vm2115, %v1951
        %2123 = vst.msk [vmem:[%s218 + $0x38] sm:$0xff] %vm2115, %v1952
        %2124 = vst.msk [vmem:[%s218 + $0x40] sm:$0xff] %vm2115, %v1953
        %2125 = vst.msk [vmem:[%s218 + $0x48] sm:$0xff] %vm2115, %v1954
        %2126 = vst.msk [vmem:[%s218 + $0x50] sm:$0xff] %vm2115, %v1955
        %2127 = vst.msk [vmem:[%s218 + $0x58] sm:$0xff] %vm2115, %v1956
        %2128 = vst.msk [vmem:[%s218 + $0x60] sm:$0xff] %vm2115, %v1957
        %2129 = vst.msk [vmem:[%s218 + $0x68] sm:$0xff] %vm2115, %v1958
        %2130 = vst.msk [vmem:[%s218 + $0x70] sm:$0xff] %vm2115, %v1959
        %2131 = vst.msk [vmem:[%s218 + $0x78] sm:$0xff] %vm2115, %v1960
        %2132 = vst.msk [vmem:[%s218 + $0x80] sm:$0xff] %vm2115, %v1961
        %2133 = vst.msk [vmem:[%s218 + $0x88] sm:$0xff] %vm2115, %v1962
        %2134 = vst.msk [vmem:[%s218 + $0x90] sm:$0xff] %vm2115, %v1963
        %2135 = vst.msk [vmem:[%s218 + $0x98] sm:$0xff] %vm2115, %v1964
        %2136 = vst.msk [vmem:[%s218 + $0xa0] sm:$0xff] %vm2115, %v1965
        %2137 = vst.msk [vmem:[%s218 + $0xa8] sm:$0xff] %vm2115, %v1966
        %2138 = vst.msk [vmem:[%s218 + $0xb0] sm:$0xff] %vm2115, %v1967
        %2139 = vst.msk [vmem:[%s218 + $0xb8] sm:$0xff] %vm2115, %v1968
        %2140 = vst.msk [vmem:[%s218 + $0xc0] sm:$0xff] %vm2115, %v1969
        %2141 = vst.msk [vmem:[%s218 + $0xc8] sm:$0xff] %vm2115, %v1970
        %2142 = vst.msk [vmem:[%s218 + $0xd0] sm:$0xff] %vm2115, %v1971
        %2143 = vst.msk [vmem:[%s218 + $0xd8] sm:$0xff] %vm2115, %v1972
        %2144 = vst.msk [vmem:[%s218 + $0xe0] sm:$0xff] %vm2115, %v1973
        %2145 = vst.msk [vmem:[%s218 + $0xe8] sm:$0xff] %vm2115, %v1974
        %2146 = vst.msk [vmem:[%s218 + $0xf0] sm:$0xff] %vm2115, %v1975
        %2147 = vst.msk [vmem:[%s218 + $0xf8] sm:$0xff] %vm2115, %v1976
        %2148 = vst.msk [vmem:[%s218 + $0x100] sm:$0xff] %vm2115, %v1977
        %2149 = vst.msk [vmem:[%s218 + $0x108] sm:$0xff] %vm2115, %v1978
        %2150 = vst.msk [vmem:[%s218 + $0x110] sm:$0xff] %vm2115, %v1979
        %2151 = vst.msk [vmem:[%s218 + $0x118] sm:$0xff] %vm2115, %v1980
        %2152 = vst.msk [vmem:[%s218 + $0x120] sm:$0xff] %vm2115, %v1981
        %2153 = vst.msk [vmem:[%s218 + $0x128] sm:$0xff] %vm2115, %v1982
        %2154 = vst.msk [vmem:[%s218 + $0x130] sm:$0xff] %vm2115, %v1983
        %2155 = vst.msk [vmem:[%s218 + $0x138] sm:$0xff] %vm2115, %v1984
        %2156 = vst.msk [vmem:[%s218 + $0x140] sm:$0xff] %vm2115, %v1985
        %2157 = vst.msk [vmem:[%s218 + $0x148] sm:$0xff] %vm2115, %v1986
        %2158 = vst.msk [vmem:[%s218 + $0x150] sm:$0xff] %vm2115, %v1987
        %2159 = vst.msk [vmem:[%s218 + $0x158] sm:$0xff] %vm2115, %v1988
        %2160 = vst.msk [vmem:[%s218 + $0x160] sm:$0xff] %vm2115, %v1989
        %2161 = vst.msk [vmem:[%s218 + $0x168] sm:$0xff] %vm2115, %v1990
        %2162 = vst.msk [vmem:[%s218 + $0x170] sm:$0xff] %vm2115, %v1991
        %2163 = vst.msk [vmem:[%s218 + $0x178] sm:$0xff] %vm2115, %v1992
        %2164 = vst.msk [vmem:[%s218 + $0x180] sm:$0xff] %vm2115, %v1993
        %2165 = vst.msk [vmem:[%s218 + $0x188] sm:$0xff] %vm2115, %v1994
        %2166 = vst.msk [vmem:[%s218 + $0x190] sm:$0xff] %vm2115, %v1995
        %2167 = vst.msk [vmem:[%s218 + $0x198] sm:$0xff] %vm2115, %v1996
        %2168 = vst.msk [vmem:[%s218 + $0x1a0] sm:$0xff] %vm2115, %v1997
        %2169 = vst.msk [vmem:[%s218 + $0x1a8] sm:$0xff] %vm2115, %v1998
        %2170 = vst.msk [vmem:[%s218 + $0x1b0] sm:$0xff] %vm2115, %v1999
        %2171 = vst.msk [vmem:[%s218 + $0x1b8] sm:$0xff] %vm2115, %v2000
        %2172 = vst.msk [vmem:[%s218 + $0x1c0] sm:$0xff] %vm2115, %v2001
        %2173 = vst.msk [vmem:[%s218 + $0x1c8] sm:$0xff] %vm2115, %v2002
        %2174 = vst.msk [vmem:[%s218 + $0x1d0] sm:$0xff] %vm2115, %v2003
        %2175 = vst.msk [vmem:[%s218 + $0x1d8] sm:$0xff] %vm2115, %v2004
        %2176 = vst.msk [vmem:[%s218 + $0x1e0] sm:$0xff] %vm2115, %v2005
        %2177 = vst.msk [vmem:[%s218 + $0x1e8] sm:$0xff] %vm2115, %v2006
        %2178 = vst.msk [vmem:[%s218 + $0x1f0] sm:$0xff] %vm2115, %v2007
        %2179 = vst.msk [vmem:[%s218 + $0x1f8] sm:$0xff] %vm2115, %v2008
        %2180 = vst.msk [vmem:[%s218 + $0x200] sm:$0xff] %vm2115, %v2009
        %2181 = vst.msk [vmem:[%s218 + $0x208] sm:$0xff] %vm2115, %v2010
        %2182 = vst.msk [vmem:[%s218 + $0x210] sm:$0xff] %vm2115, %v2011
        %2183 = vst.msk [vmem:[%s218 + $0x218] sm:$0xff] %vm2115, %v2012
        %2184 = vst.msk [vmem:[%s218 + $0x220] sm:$0xff] %vm2115, %v2013
        %2185 = vst.msk [vmem:[%s218 + $0x228] sm:$0xff] %vm2115, %v2014
        %2186 = vst.msk [vmem:[%s218 + $0x230] sm:$0xff] %vm2115, %v2015
        %2187 = vst.msk [vmem:[%s218 + $0x238] sm:$0xff] %vm2115, %v2016
        %2188 = vst.msk [vmem:[%s218 + $0x240] sm:$0xff] %vm2115, %v2017
        %2189 = vst.msk [vmem:[%s218 + $0x248] sm:$0xff] %vm2115, %v2018
        %2190 = vst.msk [vmem:[%s218 + $0x250] sm:$0xff] %vm2115, %v2019
        %2191 = vst.msk [vmem:[%s218 + $0x258] sm:$0xff] %vm2115, %v2020
        %2192 = vst.msk [vmem:[%s218 + $0x260] sm:$0xff] %vm2115, %v2021
        %2193 = vst.msk [vmem:[%s218 + $0x268] sm:$0xff] %vm2115, %v2022
        %2194 = vst.msk [vmem:[%s218 + $0x270] sm:$0xff] %vm2115, %v2023
        %2195 = vst.msk [vmem:[%s218 + $0x278] sm:$0xff] %vm2115, %v2024
        %2196 = vst.msk [vmem:[%s218 + $0x280] sm:$0xff] %vm2115, %v2025
        %2197 = vst.msk [vmem:[%s218 + $0x288] sm:$0xff] %vm2115, %v2026
        %2198 = vst.msk [vmem:[%s218 + $0x290] sm:$0xff] %vm2115, %v2027
        %2199 = vst.msk [vmem:[%s218 + $0x298] sm:$0xff] %vm2115, %v2028
        %vm2200 = vcmask 785408
        %v2201 = vsel %vm2200, %v1442, 0.0
        %v2202 = vadd.f32 %v1441, %v2201
        %2203 = vadd.xlane.f32.xlu0 %v2202
        %v2204 = vpop.xlane.xlu0 %2203
        %v2205 = vsel %vm2200, %v1444, 0.0
        %v2206 = vadd.f32 %v1443, %v2205
        %2207 = vadd.xlane.f32.xlu0 %v2206
        %v2208 = vpop.xlane.xlu0 %2207
        %v2209 = vsel %vm2200, %v1446, 0.0
        %v2210 = vadd.f32 %v1445, %v2209
        %2211 = vadd.xlane.f32.xlu0 %v2210
        %v2212 = vpop.xlane.xlu0 %2211
        %v2213 = vsel %vm2200, %v1448, 0.0
        %v2214 = vadd.f32 %v1447, %v2213
        %2215 = vadd.xlane.f32.xlu0 %v2214
        %v2216 = vpop.xlane.xlu0 %2215
        %v2217 = vsel %vm2200, %v1450, 0.0
        %v2218 = vadd.f32 %v1449, %v2217
        %2219 = vadd.xlane.f32.xlu0 %v2218
        %v2220 = vpop.xlane.xlu0 %2219
        %v2221 = vsel %vm2200, %v1452, 0.0
        %v2222 = vadd.f32 %v1451, %v2221
        %2223 = vadd.xlane.f32.xlu0 %v2222
        %v2224 = vpop.xlane.xlu0 %2223
        %v2225 = vsel %vm2200, %v1454, 0.0
        %v2226 = vadd.f32 %v1453, %v2225
        %2227 = vadd.xlane.f32.xlu0 %v2226
        %v2228 = vpop.xlane.xlu0 %2227
        %v2229 = vsel %vm2200, %v1456, 0.0
        %v2230 = vadd.f32 %v1455, %v2229
        %2231 = vadd.xlane.f32.xlu0 %v2230
        %v2232 = vpop.xlane.xlu0 %2231
        %v2233 = vsel %vm2200, %v1458, 0.0
        %v2234 = vadd.f32 %v1457, %v2233
        %2235 = vadd.xlane.f32.xlu0 %v2234
        %v2236 = vpop.xlane.xlu0 %2235
        %v2237 = vsel %vm2200, %v1460, 0.0
        %v2238 = vadd.f32 %v1459, %v2237
        %2239 = vadd.xlane.f32.xlu0 %v2238
        %v2240 = vpop.xlane.xlu0 %2239
        %v2241 = vsel %vm2200, %v1462, 0.0
        %v2242 = vadd.f32 %v1461, %v2241
        %2243 = vadd.xlane.f32.xlu0 %v2242
        %v2244 = vpop.xlane.xlu0 %2243
        %v2245 = vsel %vm2200, %v1464, 0.0
        %v2246 = vadd.f32 %v1463, %v2245
        %2247 = vadd.xlane.f32.xlu0 %v2246
        %v2248 = vpop.xlane.xlu0 %2247
        %v2249 = vsel %vm2200, %v1466, 0.0
        %v2250 = vadd.f32 %v1465, %v2249
        %2251 = vadd.xlane.f32.xlu0 %v2250
        %v2252 = vpop.xlane.xlu0 %2251
        %v2253 = vsel %vm2200, %v1468, 0.0
        %v2254 = vadd.f32 %v1467, %v2253
        %2255 = vadd.xlane.f32.xlu0 %v2254
        %v2256 = vpop.xlane.xlu0 %2255
        %v2257 = vsel %vm2200, %v1470, 0.0
        %v2258 = vadd.f32 %v1469, %v2257
        %2259 = vadd.xlane.f32.xlu0 %v2258
        %v2260 = vpop.xlane.xlu0 %2259
        %v2261 = vsel %vm2200, %v1472, 0.0
        %v2262 = vadd.f32 %v1471, %v2261
        %2263 = vadd.xlane.f32.xlu0 %v2262
        %v2264 = vpop.xlane.xlu0 %2263
        %v2265 = vsel %vm2200, %v1474, 0.0
        %v2266 = vadd.f32 %v1473, %v2265
        %2267 = vadd.xlane.f32.xlu0 %v2266
        %v2268 = vpop.xlane.xlu0 %2267
        %v2269 = vsel %vm2200, %v1476, 0.0
        %v2270 = vadd.f32 %v1475, %v2269
        %2271 = vadd.xlane.f32.xlu0 %v2270
        %v2272 = vpop.xlane.xlu0 %2271
        %v2273 = vsel %vm2200, %v1478, 0.0
        %v2274 = vadd.f32 %v1477, %v2273
        %2275 = vadd.xlane.f32.xlu0 %v2274
        %v2276 = vpop.xlane.xlu0 %2275
        %v2277 = vsel %vm2200, %v1480, 0.0
        %v2278 = vadd.f32 %v1479, %v2277
        %2279 = vadd.xlane.f32.xlu0 %v2278
        %v2280 = vpop.xlane.xlu0 %2279
        %v2281 = vsel %vm2200, %v1482, 0.0
        %v2282 = vadd.f32 %v1481, %v2281
        %2283 = vadd.xlane.f32.xlu0 %v2282
        %v2284 = vpop.xlane.xlu0 %2283
        %v2285 = vsel %vm2200, %v1484, 0.0
        %v2286 = vadd.f32 %v1483, %v2285
        %2287 = vadd.xlane.f32.xlu0 %v2286
        %v2288 = vpop.xlane.xlu0 %2287
        %v2289 = vsel %vm2200, %v1486, 0.0
        %v2290 = vadd.f32 %v1485, %v2289
        %2291 = vadd.xlane.f32.xlu0 %v2290
        %v2292 = vpop.xlane.xlu0 %2291
        %v2293 = vsel %vm2200, %v1488, 0.0
        %v2294 = vadd.f32 %v1487, %v2293
        %2295 = vadd.xlane.f32.xlu0 %v2294
        %v2296 = vpop.xlane.xlu0 %2295
        %v2297 = vsel %vm2200, %v1490, 0.0
        %v2298 = vadd.f32 %v1489, %v2297
        %2299 = vadd.xlane.f32.xlu0 %v2298
        %v2300 = vpop.xlane.xlu0 %2299
        %v2301 = vsel %vm2200, %v1492, 0.0
        %v2302 = vadd.f32 %v1491, %v2301
        %2303 = vadd.xlane.f32.xlu0 %v2302
        %v2304 = vpop.xlane.xlu0 %2303
        %v2305 = vsel %vm2200, %v1494, 0.0
        %v2306 = vadd.f32 %v1493, %v2305
        %2307 = vadd.xlane.f32.xlu0 %v2306
        %v2308 = vpop.xlane.xlu0 %2307
        %v2309 = vsel %vm2200, %v1496, 0.0
        %v2310 = vadd.f32 %v1495, %v2309
        %2311 = vadd.xlane.f32.xlu0 %v2310
        %v2312 = vpop.xlane.xlu0 %2311
        %v2313 = vsel %vm2200, %v1498, 0.0
        %v2314 = vadd.f32 %v1497, %v2313
        %2315 = vadd.xlane.f32.xlu0 %v2314
        %v2316 = vpop.xlane.xlu0 %2315
        %v2317 = vsel %vm2200, %v1500, 0.0
        %v2318 = vadd.f32 %v1499, %v2317
        %2319 = vadd.xlane.f32.xlu0 %v2318
        %v2320 = vpop.xlane.xlu0 %2319
        %v2321 = vsel %vm2200, %v1502, 0.0
        %v2322 = vadd.f32 %v1501, %v2321
        %2323 = vadd.xlane.f32.xlu0 %v2322
        %v2324 = vpop.xlane.xlu0 %2323
        %v2325 = vsel %vm2200, %v1504, 0.0
        %v2326 = vadd.f32 %v1503, %v2325
        %2327 = vadd.xlane.f32.xlu0 %v2326
        %v2328 = vpop.xlane.xlu0 %2327
        %v2329 = vsel %vm2200, %v1506, 0.0
        %v2330 = vadd.f32 %v1505, %v2329
        %2331 = vadd.xlane.f32.xlu0 %v2330
        %v2332 = vpop.xlane.xlu0 %2331
        %v2333 = vsel %vm2200, %v1508, 0.0
        %v2334 = vadd.f32 %v1507, %v2333
        %2335 = vadd.xlane.f32.xlu0 %v2334
        %v2336 = vpop.xlane.xlu0 %2335
        %v2337 = vsel %vm2200, %v1510, 0.0
        %v2338 = vadd.f32 %v1509, %v2337
        %2339 = vadd.xlane.f32.xlu0 %v2338
        %v2340 = vpop.xlane.xlu0 %2339
        %v2341 = vsel %vm2200, %v1512, 0.0
        %v2342 = vadd.f32 %v1511, %v2341
        %2343 = vadd.xlane.f32.xlu0 %v2342
        %v2344 = vpop.xlane.xlu0 %2343
        %v2345 = vsel %vm2200, %v1514, 0.0
        %v2346 = vadd.f32 %v1513, %v2345
        %2347 = vadd.xlane.f32.xlu0 %v2346
        %v2348 = vpop.xlane.xlu0 %2347
        %v2349 = vsel %vm2200, %v1516, 0.0
        %v2350 = vadd.f32 %v1515, %v2349
        %2351 = vadd.xlane.f32.xlu0 %v2350
        %v2352 = vpop.xlane.xlu0 %2351
        %v2353 = vsel %vm2200, %v1518, 0.0
        %v2354 = vadd.f32 %v1517, %v2353
        %2355 = vadd.xlane.f32.xlu0 %v2354
        %v2356 = vpop.xlane.xlu0 %2355
        %v2357 = vsel %vm2200, %v1520, 0.0
        %v2358 = vadd.f32 %v1519, %v2357
        %2359 = vadd.xlane.f32.xlu0 %v2358
        %v2360 = vpop.xlane.xlu0 %2359
        %v2361 = vsel %vm2200, %v1522, 0.0
        %v2362 = vadd.f32 %v1521, %v2361
        %2363 = vadd.xlane.f32.xlu0 %v2362
        %v2364 = vpop.xlane.xlu0 %2363
        %v2365 = vsel %vm2200, %v1524, 0.0
        %v2366 = vadd.f32 %v1523, %v2365
        %2367 = vadd.xlane.f32.xlu0 %v2366
        %v2368 = vpop.xlane.xlu0 %2367
        %v2369 = vsel %vm2200, %v1526, 0.0
        %v2370 = vadd.f32 %v1525, %v2369
        %2371 = vadd.xlane.f32.xlu0 %v2370
        %v2372 = vpop.xlane.xlu0 %2371
        %v2373 = vsel %vm2200, %v1528, 0.0
        %v2374 = vadd.f32 %v1527, %v2373
        %2375 = vadd.xlane.f32.xlu0 %v2374
        %v2376 = vpop.xlane.xlu0 %2375
        %v2377 = vsel %vm2200, %v1530, 0.0
        %v2378 = vadd.f32 %v1529, %v2377
        %2379 = vadd.xlane.f32.xlu0 %v2378
        %v2380 = vpop.xlane.xlu0 %2379
        %v2381 = vsel %vm2200, %v1532, 0.0
        %v2382 = vadd.f32 %v1531, %v2381
        %2383 = vadd.xlane.f32.xlu0 %v2382
        %v2384 = vpop.xlane.xlu0 %2383
        %v2385 = vsel %vm2200, %v1534, 0.0
        %v2386 = vadd.f32 %v1533, %v2385
        %2387 = vadd.xlane.f32.xlu0 %v2386
        %v2388 = vpop.xlane.xlu0 %2387
        %v2389 = vsel %vm2200, %v1536, 0.0
        %v2390 = vadd.f32 %v1535, %v2389
        %2391 = vadd.xlane.f32.xlu0 %v2390
        %v2392 = vpop.xlane.xlu0 %2391
        %v2393 = vsel %vm2200, %v1538, 0.0
        %v2394 = vadd.f32 %v1537, %v2393
        %2395 = vadd.xlane.f32.xlu0 %v2394
        %v2396 = vpop.xlane.xlu0 %2395
        %v2397 = vsel %vm2200, %v1540, 0.0
        %v2398 = vadd.f32 %v1539, %v2397
        %2399 = vadd.xlane.f32.xlu0 %v2398
        %v2400 = vpop.xlane.xlu0 %2399
        %v2401 = vsel %vm2200, %v1542, 0.0
        %v2402 = vadd.f32 %v1541, %v2401
        %2403 = vadd.xlane.f32.xlu0 %v2402
        %v2404 = vpop.xlane.xlu0 %2403
        %v2405 = vsel %vm2200, %v1544, 0.0
        %v2406 = vadd.f32 %v1543, %v2405
        %2407 = vadd.xlane.f32.xlu0 %v2406
        %v2408 = vpop.xlane.xlu0 %2407
        %v2409 = vsel %vm2200, %v1546, 0.0
        %v2410 = vadd.f32 %v1545, %v2409
        %2411 = vadd.xlane.f32.xlu0 %v2410
        %v2412 = vpop.xlane.xlu0 %2411
        %v2413 = vsel %vm2200, %v1548, 0.0
        %v2414 = vadd.f32 %v1547, %v2413
        %2415 = vadd.xlane.f32.xlu0 %v2414
        %v2416 = vpop.xlane.xlu0 %2415
        %v2417 = vsel %vm2200, %v1550, 0.0
        %v2418 = vadd.f32 %v1549, %v2417
        %2419 = vadd.xlane.f32.xlu0 %v2418
        %v2420 = vpop.xlane.xlu0 %2419
        %v2421 = vsel %vm2200, %v1552, 0.0
        %v2422 = vadd.f32 %v1551, %v2421
        %2423 = vadd.xlane.f32.xlu0 %v2422
        %v2424 = vpop.xlane.xlu0 %2423
        %v2425 = vsel %vm2200, %v1554, 0.0
        %v2426 = vadd.f32 %v1553, %v2425
        %2427 = vadd.xlane.f32.xlu0 %v2426
        %v2428 = vpop.xlane.xlu0 %2427
        %v2429 = vsel %vm2200, %v1556, 0.0
        %v2430 = vadd.f32 %v1555, %v2429
        %2431 = vadd.xlane.f32.xlu0 %v2430
        %v2432 = vpop.xlane.xlu0 %2431
        %v2433 = vsel %vm2200, %v1558, 0.0
        %v2434 = vadd.f32 %v1557, %v2433
        %2435 = vadd.xlane.f32.xlu0 %v2434
        %v2436 = vpop.xlane.xlu0 %2435
        %v2437 = vsel %vm2200, %v1560, 0.0
        %v2438 = vadd.f32 %v1559, %v2437
        %2439 = vadd.xlane.f32.xlu0 %v2438
        %v2440 = vpop.xlane.xlu0 %2439
        %v2441 = vsel %vm2200, %v1562, 0.0
        %v2442 = vadd.f32 %v1561, %v2441
        %2443 = vadd.xlane.f32.xlu0 %v2442
        %v2444 = vpop.xlane.xlu0 %2443
        %v2445 = vsel %vm2200, %v1564, 0.0
        %v2446 = vadd.f32 %v1563, %v2445
        %2447 = vadd.xlane.f32.xlu0 %v2446
        %v2448 = vpop.xlane.xlu0 %2447
        %v2449 = vsel %vm2200, %v1566, 0.0
        %v2450 = vadd.f32 %v1565, %v2449
        %2451 = vadd.xlane.f32.xlu0 %v2450
        %v2452 = vpop.xlane.xlu0 %2451
        %v2453 = vsel %vm2200, %v1568, 0.0
        %v2454 = vadd.f32 %v1567, %v2453
        %2455 = vadd.xlane.f32.xlu0 %v2454
        %v2456 = vpop.xlane.xlu0 %2455
        %v2457 = vsel %vm2200, %v1570, 0.0
        %v2458 = vadd.f32 %v1569, %v2457
        %2459 = vadd.xlane.f32.xlu0 %v2458
        %v2460 = vpop.xlane.xlu0 %2459
        %v2461 = vsel %vm2200, %v1572, 0.0
        %v2462 = vadd.f32 %v1571, %v2461
        %2463 = vadd.xlane.f32.xlu0 %v2462
        %v2464 = vpop.xlane.xlu0 %2463
        %v2465 = vsel %vm2200, %v1574, 0.0
        %v2466 = vadd.f32 %v1573, %v2465
        %2467 = vadd.xlane.f32.xlu0 %v2466
        %v2468 = vpop.xlane.xlu0 %2467
        %v2469 = vsel %vm2200, %v1576, 0.0
        %v2470 = vadd.f32 %v1575, %v2469
        %2471 = vadd.xlane.f32.xlu0 %v2470
        %v2472 = vpop.xlane.xlu0 %2471
        %v2473 = vsel %vm2200, %v1578, 0.0
        %v2474 = vadd.f32 %v1577, %v2473
        %2475 = vadd.xlane.f32.xlu0 %v2474
        %v2476 = vpop.xlane.xlu0 %2475
        %v2477 = vsel %vm2200, %v1580, 0.0
        %v2478 = vadd.f32 %v1579, %v2477
        %2479 = vadd.xlane.f32.xlu0 %v2478
        %v2480 = vpop.xlane.xlu0 %2479
        %v2481 = vsel %vm2200, %v1582, 0.0
        %v2482 = vadd.f32 %v1581, %v2481
        %2483 = vadd.xlane.f32.xlu0 %v2482
        %v2484 = vpop.xlane.xlu0 %2483
        %v2485 = vsel %vm2200, %v1584, 0.0
        %v2486 = vadd.f32 %v1583, %v2485
        %2487 = vadd.xlane.f32.xlu0 %v2486
        %v2488 = vpop.xlane.xlu0 %2487
        %v2489 = vsel %vm2200, %v1586, 0.0
        %v2490 = vadd.f32 %v1585, %v2489
        %2491 = vadd.xlane.f32.xlu0 %v2490
        %v2492 = vpop.xlane.xlu0 %2491
        %v2493 = vsel %vm2200, %v1588, 0.0
        %v2494 = vadd.f32 %v1587, %v2493
        %2495 = vadd.xlane.f32.xlu0 %v2494
        %v2496 = vpop.xlane.xlu0 %2495
        %v2497 = vsel %vm2200, %v1590, 0.0
        %v2498 = vadd.f32 %v1589, %v2497
        %2499 = vadd.xlane.f32.xlu0 %v2498
        %v2500 = vpop.xlane.xlu0 %2499
        %v2501 = vsel %vm2200, %v1592, 0.0
        %v2502 = vadd.f32 %v1591, %v2501
        %2503 = vadd.xlane.f32.xlu0 %v2502
        %v2504 = vpop.xlane.xlu0 %2503
        %v2505 = vsel %vm2200, %v1594, 0.0
        %v2506 = vadd.f32 %v1593, %v2505
        %2507 = vadd.xlane.f32.xlu0 %v2506
        %v2508 = vpop.xlane.xlu0 %2507
        %v2509 = vsel %vm2200, %v1596, 0.0
        %v2510 = vadd.f32 %v1595, %v2509
        %2511 = vadd.xlane.f32.xlu0 %v2510
        %v2512 = vpop.xlane.xlu0 %2511
        %v2513 = vsel %vm2200, %v1598, 0.0
        %v2514 = vadd.f32 %v1597, %v2513
        %2515 = vadd.xlane.f32.xlu0 %v2514
        %v2516 = vpop.xlane.xlu0 %2515
        %v2517 = vsel %vm2200, %v1600, 0.0
        %v2518 = vadd.f32 %v1599, %v2517
        %2519 = vadd.xlane.f32.xlu0 %v2518
        %v2520 = vpop.xlane.xlu0 %2519
        %v2521 = vsel %vm2200, %v1602, 0.0
        %v2522 = vadd.f32 %v1601, %v2521
        %2523 = vadd.xlane.f32.xlu0 %v2522
        %v2524 = vpop.xlane.xlu0 %2523
        %v2525 = vsel %vm2200, %v1604, 0.0
        %v2526 = vadd.f32 %v1603, %v2525
        %2527 = vadd.xlane.f32.xlu0 %v2526
        %v2528 = vpop.xlane.xlu0 %2527
        %v2529 = vsel %vm2200, %v1606, 0.0
        %v2530 = vadd.f32 %v1605, %v2529
        %2531 = vadd.xlane.f32.xlu0 %v2530
        %v2532 = vpop.xlane.xlu0 %2531
        %v2533 = vsel %vm2200, %v1608, 0.0
        %v2534 = vadd.f32 %v1607, %v2533
        %2535 = vadd.xlane.f32.xlu0 %v2534
        %v2536 = vpop.xlane.xlu0 %2535
        %v2621 = vlaneseq
        %v2622 = vand.u32 %v2621, 127
        %v2623 = vlaneseq
        %v2624 = vshrl.u32 %v2623, 7
        %v2625 = vsub.s32 %v2622, %v2624
        %v2626 = vrot.slane %v2204, %v2625
        %v2627 = vadd.s32 %v2622, 4294967288
        %v2628 = vlaneseq
        %v2629 = vshrl.u32 %v2628, 7
        %v2630 = vsub.s32 %v2627, %v2629
        %v2631 = vrot.slane %v2208, %v2630
        %vm2632 = vcmask 130112
        %v2633 = vsel %vm2632, %v2631, %v2626
        %v2634 = vadd.s32 %v2622, 4294967280
        %v2635 = vlaneseq
        %v2636 = vshrl.u32 %v2635, 7
        %v2637 = vsub.s32 %v2634, %v2636
        %v2638 = vrot.slane %v2212, %v2637
        %vm2639 = vcmask 195712
        %v2640 = vsel %vm2639, %v2638, %v2633
        %v2641 = vadd.s32 %v2622, 4294967272
        %v2642 = vlaneseq
        %v2643 = vshrl.u32 %v2642, 7
        %v2644 = vsub.s32 %v2641, %v2643
        %v2645 = vrot.slane %v2216, %v2644
        %vm2646 = vcmask 261312
        %v2647 = vsel %vm2646, %v2645, %v2640
        %v2648 = vadd.s32 %v2622, 4294967264
        %v2649 = vlaneseq
        %v2650 = vshrl.u32 %v2649, 7
        %v2651 = vsub.s32 %v2648, %v2650
        %v2652 = vrot.slane %v2220, %v2651
        %vm2653 = vcmask 326912
        %v2654 = vsel %vm2653, %v2652, %v2647
        %v2655 = vadd.s32 %v2622, 4294967256
        %v2656 = vlaneseq
        %v2657 = vshrl.u32 %v2656, 7
        %v2658 = vsub.s32 %v2655, %v2657
        %v2659 = vrot.slane %v2224, %v2658
        %vm2660 = vcmask 392512
        %v2661 = vsel %vm2660, %v2659, %v2654
        %v2662 = vadd.s32 %v2622, 4294967248
        %v2663 = vlaneseq
        %v2664 = vshrl.u32 %v2663, 7
        %v2665 = vsub.s32 %v2662, %v2664
        %v2666 = vrot.slane %v2228, %v2665
        %vm2667 = vcmask 458112
        %v2668 = vsel %vm2667, %v2666, %v2661
        %v2669 = vadd.s32 %v2622, 4294967240
        %v2670 = vlaneseq
        %v2671 = vshrl.u32 %v2670, 7
        %v2672 = vsub.s32 %v2669, %v2671
        %v2673 = vrot.slane %v2232, %v2672
        %vm2674 = vcmask 523712
        %v2675 = vsel %vm2674, %v2673, %v2668
        %v2676 = vadd.s32 %v2622, 4294967232
        %v2677 = vlaneseq
        %v2678 = vshrl.u32 %v2677, 7
        %v2679 = vsub.s32 %v2676, %v2678
        %v2680 = vrot.slane %v2236, %v2679
        %vm2681 = vcmask 589312
        %v2682 = vsel %vm2681, %v2680, %v2675
        %v2683 = vadd.s32 %v2622, 4294967224
        %v2684 = vlaneseq
        %v2685 = vshrl.u32 %v2684, 7
        %v2686 = vsub.s32 %v2683, %v2685
        %v2687 = vrot.slane %v2240, %v2686
        %vm2688 = vcmask 654912
        %v2689 = vsel %vm2688, %v2687, %v2682
        %v2690 = vadd.s32 %v2622, 4294967216
        %v2691 = vlaneseq
        %v2692 = vshrl.u32 %v2691, 7
        %v2693 = vsub.s32 %v2690, %v2692
        %v2694 = vrot.slane %v2244, %v2693
        %vm2695 = vcmask 720512
        %v2696 = vsel %vm2695, %v2694, %v2689
        %v2697 = vadd.s32 %v2622, 4294967208
        %v2698 = vlaneseq
        %v2699 = vshrl.u32 %v2698, 7
        %v2700 = vsub.s32 %v2697, %v2699
        %v2701 = vrot.slane %v2248, %v2700
        %vm2702 = vcmask 786112
        %v2703 = vsel %vm2702, %v2701, %v2696
        %v2704 = vadd.s32 %v2622, 4294967200
        %v2705 = vlaneseq
        %v2706 = vshrl.u32 %v2705, 7
        %v2707 = vsub.s32 %v2704, %v2706
        %v2708 = vrot.slane %v2252, %v2707
        %vm2709 = vcmask 851712
        %v2710 = vsel %vm2709, %v2708, %v2703
        %v2711 = vadd.s32 %v2622, 4294967192
        %v2712 = vlaneseq
        %v2713 = vshrl.u32 %v2712, 7
        %v2714 = vsub.s32 %v2711, %v2713
        %v2715 = vrot.slane %v2256, %v2714
        %vm2716 = vcmask 917312
        %v2717 = vsel %vm2716, %v2715, %v2710
        %v2718 = vadd.s32 %v2622, 4294967184
        %v2719 = vlaneseq
        %v2720 = vshrl.u32 %v2719, 7
        %v2721 = vsub.s32 %v2718, %v2720
        %v2722 = vrot.slane %v2260, %v2721
        %vm2723 = vcmask 982912
        %v2724 = vsel %vm2723, %v2722, %v2717
        %v2725 = vadd.s32 %v2622, 4294967176
        %v2726 = vlaneseq
        %v2727 = vshrl.u32 %v2726, 7
        %v2728 = vsub.s32 %v2725, %v2727
        %v2729 = vrot.slane %v2264, %v2728
        %vm2730 = vcmask 1048512
        %v2731 = vsel %vm2730, %v2729, %v2724
        %v2732 = vlaneseq
        %v2733 = vshrl.u32 %v2732, 7
        %v2734 = vsub.s32 %v2622, %v2733
        %v2735 = vrot.slane %v2268, %v2734
        %v2736 = vlaneseq
        %v2737 = vshrl.u32 %v2736, 7
        %v2738 = vsub.s32 %v2627, %v2737
        %v2739 = vrot.slane %v2272, %v2738
        %v2740 = vsel %vm2632, %v2739, %v2735
        %v2741 = vlaneseq
        %v2742 = vshrl.u32 %v2741, 7
        %v2743 = vsub.s32 %v2634, %v2742
        %v2744 = vrot.slane %v2276, %v2743
        %v2745 = vsel %vm2639, %v2744, %v2740
        %v2746 = vlaneseq
        %v2747 = vshrl.u32 %v2746, 7
        %v2748 = vsub.s32 %v2641, %v2747
        %v2749 = vrot.slane %v2280, %v2748
        %v2750 = vsel %vm2646, %v2749, %v2745
        %v2751 = vlaneseq
        %v2752 = vshrl.u32 %v2751, 7
        %v2753 = vsub.s32 %v2648, %v2752
        %v2754 = vrot.slane %v2284, %v2753
        %v2755 = vsel %vm2653, %v2754, %v2750
        %v2756 = vlaneseq
        %v2757 = vshrl.u32 %v2756, 7
        %v2758 = vsub.s32 %v2655, %v2757
        %v2759 = vrot.slane %v2288, %v2758
        %v2760 = vsel %vm2660, %v2759, %v2755
        %v2761 = vlaneseq
        %v2762 = vshrl.u32 %v2761, 7
        %v2763 = vsub.s32 %v2662, %v2762
        %v2764 = vrot.slane %v2292, %v2763
        %v2765 = vsel %vm2667, %v2764, %v2760
        %v2766 = vlaneseq
        %v2767 = vshrl.u32 %v2766, 7
        %v2768 = vsub.s32 %v2669, %v2767
        %v2769 = vrot.slane %v2296, %v2768
        %v2770 = vsel %vm2674, %v2769, %v2765
        %v2771 = vlaneseq
        %v2772 = vshrl.u32 %v2771, 7
        %v2773 = vsub.s32 %v2676, %v2772
        %v2774 = vrot.slane %v2300, %v2773
        %v2775 = vsel %vm2681, %v2774, %v2770
        %v2776 = vlaneseq
        %v2777 = vshrl.u32 %v2776, 7
        %v2778 = vsub.s32 %v2683, %v2777
        %v2779 = vrot.slane %v2304, %v2778
        %v2780 = vsel %vm2688, %v2779, %v2775
        %v2781 = vlaneseq
        %v2782 = vshrl.u32 %v2781, 7
        %v2783 = vsub.s32 %v2690, %v2782
        %v2784 = vrot.slane %v2308, %v2783
        %v2785 = vsel %vm2695, %v2784, %v2780
        %v2786 = vlaneseq
        %v2787 = vshrl.u32 %v2786, 7
        %v2788 = vsub.s32 %v2697, %v2787
        %v2789 = vrot.slane %v2312, %v2788
        %v2790 = vsel %vm2702, %v2789, %v2785
        %v2791 = vlaneseq
        %v2792 = vshrl.u32 %v2791, 7
        %v2793 = vsub.s32 %v2622, %v2792
        %v2794 = vrot.slane %v2316, %v2793
        %v2795 = vlaneseq
        %v2796 = vshrl.u32 %v2795, 7
        %v2797 = vsub.s32 %v2627, %v2796
        %v2798 = vrot.slane %v2320, %v2797
        %v2799 = vsel %vm2632, %v2798, %v2794
        %v2800 = vlaneseq
        %v2801 = vshrl.u32 %v2800, 7
        %v2802 = vsub.s32 %v2634, %v2801
        %v2803 = vrot.slane %v2324, %v2802
        %v2804 = vsel %vm2639, %v2803, %v2799
        %v2805 = vlaneseq
        %v2806 = vshrl.u32 %v2805, 7
        %v2807 = vsub.s32 %v2641, %v2806
        %v2808 = vrot.slane %v2328, %v2807
        %v2809 = vsel %vm2646, %v2808, %v2804
        %v2810 = vlaneseq
        %v2811 = vshrl.u32 %v2810, 7
        %v2812 = vsub.s32 %v2648, %v2811
        %v2813 = vrot.slane %v2332, %v2812
        %v2814 = vsel %vm2653, %v2813, %v2809
        %v2815 = vlaneseq
        %v2816 = vshrl.u32 %v2815, 7
        %v2817 = vsub.s32 %v2655, %v2816
        %v2818 = vrot.slane %v2336, %v2817
        %v2819 = vsel %vm2660, %v2818, %v2814
        %v2820 = vlaneseq
        %v2821 = vshrl.u32 %v2820, 7
        %v2822 = vsub.s32 %v2662, %v2821
        %v2823 = vrot.slane %v2340, %v2822
        %v2824 = vsel %vm2667, %v2823, %v2819
        %v2825 = vlaneseq
        %v2826 = vshrl.u32 %v2825, 7
        %v2827 = vsub.s32 %v2669, %v2826
        %v2828 = vrot.slane %v2344, %v2827
        %v2829 = vsel %vm2674, %v2828, %v2824
        %v2830 = vlaneseq
        %v2831 = vshrl.u32 %v2830, 7
        %v2832 = vsub.s32 %v2676, %v2831
        %v2833 = vrot.slane %v2348, %v2832
        %v2834 = vsel %vm2681, %v2833, %v2829
        %v2835 = vlaneseq
        %v2836 = vshrl.u32 %v2835, 7
        %v2837 = vsub.s32 %v2683, %v2836
        %v2838 = vrot.slane %v2352, %v2837
        %v2839 = vsel %vm2688, %v2838, %v2834
        %v2840 = vlaneseq
        %v2841 = vshrl.u32 %v2840, 7
        %v2842 = vsub.s32 %v2690, %v2841
        %v2843 = vrot.slane %v2356, %v2842
        %v2844 = vsel %vm2695, %v2843, %v2839
        %v2845 = vlaneseq
        %v2846 = vshrl.u32 %v2845, 7
        %v2847 = vsub.s32 %v2697, %v2846
        %v2848 = vrot.slane %v2360, %v2847
        %v2849 = vsel %vm2702, %v2848, %v2844
        %v2850 = vlaneseq
        %v2851 = vshrl.u32 %v2850, 7
        %v2852 = vsub.s32 %v2704, %v2851
        %v2853 = vrot.slane %v2364, %v2852
        %v2854 = vsel %vm2709, %v2853, %v2849
        %v2855 = vlaneseq
        %v2856 = vshrl.u32 %v2855, 7
        %v2857 = vsub.s32 %v2711, %v2856
        %v2858 = vrot.slane %v2368, %v2857
        %v2859 = vsel %vm2716, %v2858, %v2854
        %v2860 = vlaneseq
        %v2861 = vshrl.u32 %v2860, 7
        %v2862 = vsub.s32 %v2718, %v2861
        %v2863 = vrot.slane %v2372, %v2862
        %v2864 = vsel %vm2723, %v2863, %v2859
        %v2865 = vlaneseq
        %v2866 = vshrl.u32 %v2865, 7
        %v2867 = vsub.s32 %v2725, %v2866
        %v2868 = vrot.slane %v2376, %v2867
        %v2869 = vsel %vm2730, %v2868, %v2864
        %v2870 = vlaneseq
        %v2871 = vshrl.u32 %v2870, 7
        %v2872 = vsub.s32 %v2622, %v2871
        %v2873 = vrot.slane %v2380, %v2872
        %v2874 = vlaneseq
        %v2875 = vshrl.u32 %v2874, 7
        %v2876 = vsub.s32 %v2627, %v2875
        %v2877 = vrot.slane %v2384, %v2876
        %v2878 = vsel %vm2632, %v2877, %v2873
        %v2879 = vlaneseq
        %v2880 = vshrl.u32 %v2879, 7
        %v2881 = vsub.s32 %v2634, %v2880
        %v2882 = vrot.slane %v2388, %v2881
        %v2883 = vsel %vm2639, %v2882, %v2878
        %v2884 = vlaneseq
        %v2885 = vshrl.u32 %v2884, 7
        %v2886 = vsub.s32 %v2641, %v2885
        %v2887 = vrot.slane %v2392, %v2886
        %v2888 = vsel %vm2646, %v2887, %v2883
        %v2889 = vlaneseq
        %v2890 = vshrl.u32 %v2889, 7
        %v2891 = vsub.s32 %v2648, %v2890
        %v2892 = vrot.slane %v2396, %v2891
        %v2893 = vsel %vm2653, %v2892, %v2888
        %v2894 = vlaneseq
        %v2895 = vshrl.u32 %v2894, 7
        %v2896 = vsub.s32 %v2655, %v2895
        %v2897 = vrot.slane %v2400, %v2896
        %v2898 = vsel %vm2660, %v2897, %v2893
        %v2899 = vlaneseq
        %v2900 = vshrl.u32 %v2899, 7
        %v2901 = vsub.s32 %v2662, %v2900
        %v2902 = vrot.slane %v2404, %v2901
        %v2903 = vsel %vm2667, %v2902, %v2898
        %v2904 = vlaneseq
        %v2905 = vshrl.u32 %v2904, 7
        %v2906 = vsub.s32 %v2669, %v2905
        %v2907 = vrot.slane %v2408, %v2906
        %v2908 = vsel %vm2674, %v2907, %v2903
        %v2909 = vlaneseq
        %v2910 = vshrl.u32 %v2909, 7
        %v2911 = vsub.s32 %v2676, %v2910
        %v2912 = vrot.slane %v2412, %v2911
        %v2913 = vsel %vm2681, %v2912, %v2908
        %v2914 = vlaneseq
        %v2915 = vshrl.u32 %v2914, 7
        %v2916 = vsub.s32 %v2683, %v2915
        %v2917 = vrot.slane %v2416, %v2916
        %v2918 = vsel %vm2688, %v2917, %v2913
        %v2919 = vlaneseq
        %v2920 = vshrl.u32 %v2919, 7
        %v2921 = vsub.s32 %v2690, %v2920
        %v2922 = vrot.slane %v2420, %v2921
        %v2923 = vsel %vm2695, %v2922, %v2918
        %v2924 = vlaneseq
        %v2925 = vshrl.u32 %v2924, 7
        %v2926 = vsub.s32 %v2697, %v2925
        %v2927 = vrot.slane %v2424, %v2926
        %v2928 = vsel %vm2702, %v2927, %v2923
        %v2929 = vlaneseq
        %v2930 = vshrl.u32 %v2929, 7
        %v2931 = vsub.s32 %v2622, %v2930
        %v2932 = vrot.slane %v2428, %v2931
        %v2933 = vlaneseq
        %v2934 = vshrl.u32 %v2933, 7
        %v2935 = vsub.s32 %v2627, %v2934
        %v2936 = vrot.slane %v2432, %v2935
        %v2937 = vsel %vm2632, %v2936, %v2932
        %v2938 = vlaneseq
        %v2939 = vshrl.u32 %v2938, 7
        %v2940 = vsub.s32 %v2634, %v2939
        %v2941 = vrot.slane %v2436, %v2940
        %v2942 = vsel %vm2639, %v2941, %v2937
        %v2943 = vlaneseq
        %v2944 = vshrl.u32 %v2943, 7
        %v2945 = vsub.s32 %v2641, %v2944
        %v2946 = vrot.slane %v2440, %v2945
        %v2947 = vsel %vm2646, %v2946, %v2942
        %v2948 = vlaneseq
        %v2949 = vshrl.u32 %v2948, 7
        %v2950 = vsub.s32 %v2648, %v2949
        %v2951 = vrot.slane %v2444, %v2950
        %v2952 = vsel %vm2653, %v2951, %v2947
        %v2953 = vlaneseq
        %v2954 = vshrl.u32 %v2953, 7
        %v2955 = vsub.s32 %v2655, %v2954
        %v2956 = vrot.slane %v2448, %v2955
        %v2957 = vsel %vm2660, %v2956, %v2952
        %v2958 = vlaneseq
        %v2959 = vshrl.u32 %v2958, 7
        %v2960 = vsub.s32 %v2662, %v2959
        %v2961 = vrot.slane %v2452, %v2960
        %v2962 = vsel %vm2667, %v2961, %v2957
        %v2963 = vlaneseq
        %v2964 = vshrl.u32 %v2963, 7
        %v2965 = vsub.s32 %v2669, %v2964
        %v2966 = vrot.slane %v2456, %v2965
        %v2967 = vsel %vm2674, %v2966, %v2962
        %v2968 = vlaneseq
        %v2969 = vshrl.u32 %v2968, 7
        %v2970 = vsub.s32 %v2676, %v2969
        %v2971 = vrot.slane %v2460, %v2970
        %v2972 = vsel %vm2681, %v2971, %v2967
        %v2973 = vlaneseq
        %v2974 = vshrl.u32 %v2973, 7
        %v2975 = vsub.s32 %v2683, %v2974
        %v2976 = vrot.slane %v2464, %v2975
        %v2977 = vsel %vm2688, %v2976, %v2972
        %v2978 = vlaneseq
        %v2979 = vshrl.u32 %v2978, 7
        %v2980 = vsub.s32 %v2690, %v2979
        %v2981 = vrot.slane %v2468, %v2980
        %v2982 = vsel %vm2695, %v2981, %v2977
        %v2983 = vlaneseq
        %v2984 = vshrl.u32 %v2983, 7
        %v2985 = vsub.s32 %v2697, %v2984
        %v2986 = vrot.slane %v2472, %v2985
        %v2987 = vsel %vm2702, %v2986, %v2982
        %v2988 = vlaneseq
        %v2989 = vshrl.u32 %v2988, 7
        %v2990 = vsub.s32 %v2704, %v2989
        %v2991 = vrot.slane %v2476, %v2990
        %v2992 = vsel %vm2709, %v2991, %v2987
        %v2993 = vlaneseq
        %v2994 = vshrl.u32 %v2993, 7
        %v2995 = vsub.s32 %v2711, %v2994
        %v2996 = vrot.slane %v2480, %v2995
        %v2997 = vsel %vm2716, %v2996, %v2992
        %v2998 = vlaneseq
        %v2999 = vshrl.u32 %v2998, 7
        %v3000 = vsub.s32 %v2718, %v2999
        %v3001 = vrot.slane %v2484, %v3000
        %v3002 = vsel %vm2723, %v3001, %v2997
        %v3003 = vlaneseq
        %v3004 = vshrl.u32 %v3003, 7
        %v3005 = vsub.s32 %v2725, %v3004
        %v3006 = vrot.slane %v2488, %v3005
        %v3007 = vsel %vm2730, %v3006, %v3002
        %v3008 = vlaneseq
        %v3009 = vshrl.u32 %v3008, 7
        %v3010 = vsub.s32 %v2622, %v3009
        %v3011 = vrot.slane %v2492, %v3010
        %v3012 = vlaneseq
        %v3013 = vshrl.u32 %v3012, 7
        %v3014 = vsub.s32 %v2627, %v3013
        %v3015 = vrot.slane %v2496, %v3014
        %v3016 = vsel %vm2632, %v3015, %v3011
        %v3017 = vlaneseq
        %v3018 = vshrl.u32 %v3017, 7
        %v3019 = vsub.s32 %v2634, %v3018
        %v3020 = vrot.slane %v2500, %v3019
        %v3021 = vsel %vm2639, %v3020, %v3016
        %v3022 = vlaneseq
        %v3023 = vshrl.u32 %v3022, 7
        %v3024 = vsub.s32 %v2641, %v3023
        %v3025 = vrot.slane %v2504, %v3024
        %v3026 = vsel %vm2646, %v3025, %v3021
        %v3027 = vlaneseq
        %v3028 = vshrl.u32 %v3027, 7
        %v3029 = vsub.s32 %v2648, %v3028
        %v3030 = vrot.slane %v2508, %v3029
        %v3031 = vsel %vm2653, %v3030, %v3026
        %v3032 = vlaneseq
        %v3033 = vshrl.u32 %v3032, 7
        %v3034 = vsub.s32 %v2655, %v3033
        %v3035 = vrot.slane %v2512, %v3034
        %v3036 = vsel %vm2660, %v3035, %v3031
        %v3037 = vlaneseq
        %v3038 = vshrl.u32 %v3037, 7
        %v3039 = vsub.s32 %v2662, %v3038
        %v3040 = vrot.slane %v2516, %v3039
        %v3041 = vsel %vm2667, %v3040, %v3036
        %v3042 = vlaneseq
        %v3043 = vshrl.u32 %v3042, 7
        %v3044 = vsub.s32 %v2669, %v3043
        %v3045 = vrot.slane %v2520, %v3044
        %v3046 = vsel %vm2674, %v3045, %v3041
        %v3047 = vlaneseq
        %v3048 = vshrl.u32 %v3047, 7
        %v3049 = vsub.s32 %v2676, %v3048
        %v3050 = vrot.slane %v2524, %v3049
        %v3051 = vsel %vm2681, %v3050, %v3046
        %v3052 = vlaneseq
        %v3053 = vshrl.u32 %v3052, 7
        %v3054 = vsub.s32 %v2683, %v3053
        %v3055 = vrot.slane %v2528, %v3054
        %v3056 = vsel %vm2688, %v3055, %v3051
        %v3057 = vlaneseq
        %v3058 = vshrl.u32 %v3057, 7
        %v3059 = vsub.s32 %v2690, %v3058
        %v3060 = vrot.slane %v2532, %v3059
        %v3061 = vsel %vm2695, %v3060, %v3056
        %v3062 = vlaneseq
        %v3063 = vshrl.u32 %v3062, 7
        %v3064 = vsub.s32 %v2697, %v3063
        %v3065 = vrot.slane %v2536, %v3064
        %v3066 = vsel %vm2702, %v3065, %v3061
        %vm3067 = vcmask 1041409
        %v3068 = vsel %vm3067, %v2869, %v2731
        %vm3069 = vcmask 1042434
        %v3070 = vsel %vm3069, %v3007, %v3068
        %v3071 = vsel %vm3067, %v2928, %v2790
        %v3072 = vsel %vm3069, %v3066, %v3071
        %vm3075 = vcmask 1042432
        %v3076 = vsel %vm3075, %v3070, 0.0
        %vm3077 = vcmask 780288
        %v3078 = vsel %vm3077, %v3072, 0.0
        %v3079 = vadd.f32 %v3076, %v3078
        %3080 = vadd.xlane.f32.xlu0 %v3079
        %v3081 = vpop.xlane.xlu0 %3080
        %vm3082 = vcmask 2048
        %3083 = vst.msk [vmem:[%s233] sm:$0x7] %vm3082, %v3081
        %s3084 = sand.u32 %s117, 1
        %s3085 = scalar_lea.sflag [#allocation3], %s3084
        %s3086 = sand.u32 %s117, 1
        %s3087 = smul.addr %s3086, 672
        %s3088 = scalar_lea.vmem [#allocation2], %s3087
        %p3089 = scmp.lt.s32.totalorder %s20, 1
        %s3090 = scalar_select %p3089, %s20, 1
        %s3091 = smul.addr %s3090, 4
        %s3092 = scalar_lea.vmem %s5, %s3091
        // Predicated region
        $region37: #{tpu_custom_call.1} parent=35 // pred_check
          %p3093 = pneg %p127
        $region38: #{tpu_custom_call.1} parent=35 // pred_check_branch
          %3095 = sbr.rel (%p3093) target = $region40
        $region39: #{tpu_custom_call.1} parent=35 // pred_region
          %s3097 = ssub.s32 10752, 10752
          %3098 = vsyncadd %s3085, %s3097
          %s3099 = smul.addr %s20, 168
          %s3100 = smul.addr %s3099, 64
          %s3101 = scalar_lea.hbm %s4, %s3100
          %s3102 = sshll.u32 %s3088, 4
          %s3103 = int_to_ptr.vmem [resolvable:$true] %s3102
          %3108 = dma.vmem_to_hbm [thread:$0]  %s3103, 10752, %s3101, %s3085, 128, 128, 8
        $region40: #{tpu_custom_call.1} parent=35 // pred_fallthru
          _
        // Predicated region
        $region41: #{tpu_custom_call.1} parent=35 // pred_check
          %p3109 = pneg %p153
        $region42: #{tpu_custom_call.1} parent=35 // pred_check_branch
          %3111 = sbr.rel (%p3109) target = $region44
        $region43: #{tpu_custom_call.1} parent=35 // pred_region
          _
        $region44: #{tpu_custom_call.1} parent=35 // pred_fallthru
          _
      $region36: #{tpu_custom_call.1} parent=5 // pred_fallthru
        _
      %p3112 = scmp.le.s32.totalorder 2, %s15
      // Predicated region
      $region45: #{tpu_custom_call.1} parent=5 // pred_check
        %p3113 = pneg %p3112
      $region46: #{tpu_custom_call.1} parent=5 // pred_check_branch
        %3115 = sbr.rel (%p3113) target = $region48
      $region47: #{tpu_custom_call.1} parent=5 // pred_region
        %s3116 = ssub.s32 %s15, 2
        // Predicated region
        $region49: #{tpu_custom_call.1} parent=47 // pred_check
          %p3117 = pneg %p133
        $region50: #{tpu_custom_call.1} parent=47 // pred_check_branch
          %3119 = sbr.rel (%p3117) target = $region52
        $region51: #{tpu_custom_call.1} parent=47 // pred_region
          %s3120 = sand.u32 %s118, 1
          %s3121 = scalar_lea.sflag [#allocation3], %s3120
          %s3122 = sand.u32 %s118, 1
          %s3123 = smul.addr %s3122, 672
          %s3124 = scalar_lea.vmem [#allocation2], %s3123
          %3125 = dma.done %s3121, 10752
        $region52: #{tpu_custom_call.1} parent=47 // pred_fallthru
          _
        // Predicated region
        $region53: #{tpu_custom_call.1} parent=47 // pred_check
          %p3126 = pneg %p159
        $region54: #{tpu_custom_call.1} parent=47 // pred_check_branch
          %3128 = sbr.rel (%p3126) target = $region56
        $region55: #{tpu_custom_call.1} parent=47 // pred_region
          %p3129 = scmp.lt.s32.totalorder %s21, 1
          %s3130 = scalar_select %p3129, %s21, 1
          %s3131 = smul.addr %s3130, 4
          %s3132 = scalar_lea.vmem %s5, %s3131
        $region56: #{tpu_custom_call.1} parent=47 // pred_fallthru
          _
      $region48: #{tpu_custom_call.1} parent=5 // pred_fallthru
        _
    $region6: #{tpu_custom_call.1} parent=1 // loop_footer
      %s19 = sadd.s32 1, %s15
    $region7: #{tpu_custom_call.1} parent=1 // loop_footer_branch
      %14 = sbr.rel target = $region3
    $region8: #{tpu_custom_call.1} parent=1 // loop_exit
      _
    %3133 = vsyncpa [#allocation3], 1
    %s3134 = scalar_lea.sflag [#allocation3], 1
    %3135 = vsyncpa %s3134, 1

</llo_original>
